<compile_context>
chip_gen: v7x
topology: tpu7x:2x2x1
jax: 0.10.0
libtpu: 0.0.40
codegen_flags: <defaults>
</compile_context>

<pallas_src>
import numpy as np
import jax
import jax.numpy as jnp
from jax.experimental import pallas as pl
from jax.experimental.pallas import tpu as pltpu

# ------------------------------ architecture ------------------------------ #
C_IN, H_IN, W_IN = 4, 16, 16            # encoder input  [B, 4, 16, 16]
C1, H1, W1 = 8, 8, 8                    # after Conv2d(4->8, 3, s=2, p=1)
C2, H2, W2 = 16, 4, 4                   # after Conv2d(8->16, 3, s=2, p=1)
ENC_IN = C_IN * H_IN * W_IN             # 1024
ENC_H1 = C1 * H1 * W1                   # 512
ENC_H2 = C2 * H2 * W2                   # 256  (== nn.Flatten width == fc1 in)
FC1_IN, FC1_OUT, FC2_OUT = ENC_H2, 128, 1024
OUT_SHAPE = (4, 16, 16)                 # reshape_decoder='unflatten'

# MXU input dtype: float32 = exact semantics (and required on v5e's f32 VPU);
# set to jnp.bfloat16 on v6e/v7x for higher MXU throughput (f32 accumulation).
_MXU_DTYPE = jnp.float32


def _batch_block(batch):
    """Batch rows per grid step (largest nice divisor; whole block in VMEM)."""
    for bb in (256, 128, 64, 32, 16, 8):
        if batch >= bb and batch % bb == 0:
            return bb
    return batch


# ------------------------------ fused kernel ------------------------------ #
def _fused_kernel(x_ref, m1_ref, b1_ref, m2_ref, b2_ref,
                  w1_ref, fb1_ref, w2_ref, fb2_ref, o_ref):
    f32 = jnp.float32
    cd = _MXU_DTYPE

    def mm(a, b):  # MXU matmul with f32 accumulation
        return jnp.dot(a.astype(cd), b.astype(cd), preferred_element_type=f32)

    x = x_ref[...]                                               # [BB, 1024]
    h1 = jnp.maximum(mm(x, m1_ref[...]) + b1_ref[...], 0.0)      # conv1+ReLU  [BB, 512]
    h2 = jnp.maximum(mm(h1, m2_ref[...]) + b2_ref[...], 0.0)     # conv2+ReLU  [BB, 256]
    # h2's column order is (c, h, w) == nn.Flatten output -> feed fc1 directly.
    z = jnp.maximum(mm(h2, w1_ref[...]) + fb1_ref[...], 0.0)     # fc1+ReLU    [BB, 128]
    o_ref[...] = (mm(z, w2_ref[...]) + fb2_ref[...]).astype(o_ref.dtype)  # fc2 [BB, 1024]


# ------------------------- host-side one-time prep ------------------------- #
def _conv_as_matrix(weight, bias, H, W, stride, pad):
    """Fold a Conv2d (NCHW, zero pad) into one dense operator.

    Returns M : [Cin*H*W, Cout*Ho*Wo] and bias row [1, Cout*Ho*Wo] such that
    conv(x) flattened over (c, h, w) equals x_flat @ M + brow.
    """
    w = np.asarray(weight, np.float32)
    Cout, Cin, KH, KW = w.shape
    Ho = (H + 2 * pad - KH) // stride + 1
    Wo = (W + 2 * pad - KW) // stride + 1
    M = np.zeros((Cin * H * W, Cout * Ho * Wo), np.float32)
    for co in range(Cout):
        for ci in range(Cin):
            for kh in range(KH):
                for kw in range(KW):
                    val = w[co, ci, kh, kw]
                    for ho in range(Ho):
                        h = stride * ho - pad + kh
                        if not (0 <= h < H):
                            continue
                        for wo in range(Wo):
                            ww = stride * wo - pad + kw
                            if not (0 <= ww < W):
                                continue
                            M[ci * H * W + h * W + ww,
                              co * Ho * Wo + ho * Wo + wo] = val
    brow = np.repeat(np.asarray(bias, np.float32), Ho * Wo).reshape(1, Cout * Ho * Wo)
    return M, brow


def prepare_ops(params):
    """Build all GEMM-layout operators/weights ONCE (batch-independent)."""
    M1, b1 = _conv_as_matrix(params["conv1_w"], params["conv1_b"], H_IN, W_IN, 2, 1)
    M2, b2 = _conv_as_matrix(params["conv2_w"], params["conv2_b"], H1, W1, 2, 1)
    return {
        "M1": jnp.asarray(M1), "b1": jnp.asarray(b1),            # [1024, 512], [1, 512]
        "M2": jnp.asarray(M2), "b2": jnp.asarray(b2),            # [512, 256],  [1, 256]
        "W1": jnp.asarray(params["fc1_w"], jnp.float32),         # [256, 128]
        "fb1": jnp.asarray(params["fc1_b"], jnp.float32).reshape(1, FC1_OUT),
        "W2": jnp.asarray(params["fc2_w"], jnp.float32),         # [128, 1024]
        "fb2": jnp.asarray(params["fc2_b"], jnp.float32).reshape(1, FC2_OUT),
    }


# ------------------------------- forward pass ------------------------------ #
def autoencoder_forward(ops, x):
    """x: [B, 4, 16, 16] (NCHW) -> [B, 4, 16, 16]; single fused pallas_call."""
    B = x.shape[0]
    BB = _batch_block(B)
    grid = B // BB
    x2d = x.reshape(B, ENC_IN)            # free reshape: rows=b, cols=(c,h,w)

    out = pl.pallas_call(
        _fused_kernel,
        out_shape=jax.ShapeDtypeStruct((B, FC2_OUT), jnp.float32),
        grid=(grid,),
        in_specs=[
            pl.BlockSpec((BB, ENC_IN), lambda i: (i, 0)),        # x block
            pl.BlockSpec((ENC_IN, ENC_H1), lambda i: (0, 0)),    # conv1 operator
            pl.BlockSpec((1, ENC_H1), lambda i: (0, 0)),         # conv1 bias row
            pl.BlockSpec((ENC_H1, ENC_H2), lambda i: (0, 0)),    # conv2 operator
            pl.BlockSpec((1, ENC_H2), lambda i: (0, 0)),         # conv2 bias row
            pl.BlockSpec((FC1_IN, FC1_OUT), lambda i: (0, 0)),   # fc1 W
            pl.BlockSpec((1, FC1_OUT), lambda i: (0, 0)),        # fc1 b
            pl.BlockSpec((FC1_OUT, FC2_OUT), lambda i: (0, 0)),  # fc2 W
            pl.BlockSpec((1, FC2_OUT), lambda i: (0, 0)),        # fc2 b
        ],
        out_specs=pl.BlockSpec((BB, FC2_OUT), lambda i: (i, 0)),
        compiler_params=pltpu.CompilerParams(
            dimension_semantics=("parallel",)),  # shard batch blocks on v7x megacore
    )(x2d, ops["M1"], ops["b1"], ops["M2"], ops["b2"],
      ops["W1"], ops["fb1"], ops["W2"], ops["fb2"])

    # reshape_decoder = 'unflatten' to (4, 16, 16)
    return out.reshape((B,) + OUT_SHAPE)


# ------------------------------ params / check ----------------------------- #
def init_params(key):
    ks = jax.random.split(key, 8)
    scale = 0.1
    return {
        # encoder 'cnn': Conv2d(4,8,3,s=2,p=1)+ReLU -> Conv2d(8,16,3,s=2,p=1)+ReLU
        "conv1_w": scale * jax.random.normal(ks[0], (C1, C_IN, 3, 3), jnp.float32),
        "conv1_b": scale * jax.random.normal(ks[1], (C1,), jnp.float32),
        "conv2_w": scale * jax.random.normal(ks[2], (C2, C1, 3, 3), jnp.float32),
        "conv2_b": scale * jax.random.normal(ks[3], (C2,), jnp.float32),
        # decoder 'mlp': Linear(256,128)+ReLU -> Linear(128,1024)
        # (fc weights stored in GEMM layout [in, out] = PyTorch weight.T)
        "fc1_w": scale * jax.random.normal(ks[4], (FC1_IN, FC1_OUT), jnp.float32),
        "fc1_b": scale * jax.random.normal(ks[5], (FC1_OUT,), jnp.float32),
        "fc2_w": scale * jax.random.normal(ks[6], (FC1_OUT, FC2_OUT), jnp.float32),
        "fc2_b": scale * jax.random.normal(ks[7], (FC2_OUT,), jnp.float32),
    }


def reference_forward(params, x):
    """Pure-JAX/XLA reference matching the PyTorch module semantics."""
    hi = jax.lax.Precision.HIGHEST

    def conv(h, w, b):
        dn = jax.lax.conv_dimension_numbers(h.shape, w.shape, ("NCHW", "OIHW", "NCHW"))
        out = jax.lax.conv_general_dilated(h, w, (2, 2), ((1, 1), (1, 1)),
                                           dimension_numbers=dn, precision=hi)
        return jax.nn.relu(out + b[None, :, None, None])

    h = conv(x, params["conv1_w"], params["conv1_b"])
    h = conv(h, params["conv2_w"], params["conv2_b"])
    h = h.reshape(x.shape[0], -1)                                   # nn.Flatten
    h = jax.nn.relu(jnp.dot(h, params["fc1_w"], precision=hi) + params["fc1_b"])
    h = jnp.dot(h, params["fc2_w"], precision=hi) + params["fc2_b"]
    return h.reshape((x.shape[0],) + OUT_SHAPE)                     # nn.Unflatten


if __name__ == "__main__":
    key = jax.random.PRNGKey(0)
    k_x, k_p = jax.random.split(key)
    x = jax.random.normal(k_x, (2, C_IN, H_IN, W_IN), jnp.float32)  # NCHW, batch=2
    params = init_params(k_p)
    ops = prepare_ops(params)                                       # one-time prep

    fwd = jax.jit(autoencoder_forward)
    out = jax.block_until_ready(fwd(ops, x))
    assert out.shape == (2, 4, 16, 16) and out.dtype == jnp.float32

    ref = reference_forward(params, x)
    np.testing.assert_allclose(np.asarray(out), np.asarray(ref), rtol=1e-2, atol=1e-2)
    print("KERNEL_OK")
</pallas_src>

<mosaic_0001>
module attributes {stable_mosaic.version = 11 : i64} {
  func.func @_fused_kernel(%arg0: i32, %arg1: memref<2x1024xf32, #tpu.memory_space<vmem>>, %arg2: memref<1024x512xf32, #tpu.memory_space<vmem>>, %arg3: memref<1x512xf32, #tpu.memory_space<vmem>>, %arg4: memref<512x256xf32, #tpu.memory_space<vmem>>, %arg5: memref<1x256xf32, #tpu.memory_space<vmem>>, %arg6: memref<256x128xf32, #tpu.memory_space<vmem>>, %arg7: memref<1x128xf32, #tpu.memory_space<vmem>>, %arg8: memref<128x1024xf32, #tpu.memory_space<vmem>>, %arg9: memref<1x1024xf32, #tpu.memory_space<vmem>>, %arg10: memref<2x1024xf32, #tpu.memory_space<vmem>>) attributes {dimension_semantics = [#tpu.dimension_semantics<parallel>], iteration_bounds = array<i64: 1>, scalar_prefetch = 0 : i64, scratch_operands = 0 : i64, tpu.core_type = #tpu.core_type<tc>, window_params = [{transform_indices = @transform_0, window_bounds = array<i64: 2, 1024>}, {pipeline_mode = #tpu.pipeline_mode<synchronous>, transform_indices = @transform_1, window_bounds = array<i64: 1024, 512>}, {pipeline_mode = #tpu.pipeline_mode<synchronous>, transform_indices = @transform_2, window_bounds = array<i64: 1, 512>}, {pipeline_mode = #tpu.pipeline_mode<synchronous>, transform_indices = @transform_3, window_bounds = array<i64: 512, 256>}, {pipeline_mode = #tpu.pipeline_mode<synchronous>, transform_indices = @transform_4, window_bounds = array<i64: 1, 256>}, {pipeline_mode = #tpu.pipeline_mode<synchronous>, transform_indices = @transform_5, window_bounds = array<i64: 256, 128>}, {pipeline_mode = #tpu.pipeline_mode<synchronous>, transform_indices = @transform_6, window_bounds = array<i64: 1, 128>}, {pipeline_mode = #tpu.pipeline_mode<synchronous>, transform_indices = @transform_7, window_bounds = array<i64: 128, 1024>}, {pipeline_mode = #tpu.pipeline_mode<synchronous>, transform_indices = @transform_8, window_bounds = array<i64: 1, 1024>}, {transform_indices = @transform_9, window_bounds = array<i64: 2, 1024>}]} {
    %c0 = arith.constant 0 : index
    %c0_0 = arith.constant 0 : index
    %0 = vector.load %arg1[%c0, %c0_0] : memref<2x1024xf32, #tpu.memory_space<vmem>>, vector<2x1024xf32>
    %c0_1 = arith.constant 0 : index
    %c0_2 = arith.constant 0 : index
    %1 = vector.load %arg2[%c0_1, %c0_2] : memref<1024x512xf32, #tpu.memory_space<vmem>>, vector<1024x512xf32>
    %cst = arith.constant dense<0.000000e+00> : vector<2x512xf32>
    %2 = tpu.matmul %0, %1, %cst {dimension_numbers = #tpu.dot_dimension_numbers<[1], [0], [0], [1], [0, 0, 1, 1], [], []>} : vector<2x1024xf32>, vector<1024x512xf32>, vector<2x512xf32> -> vector<2x512xf32>
    %c0_3 = arith.constant 0 : index
    %c0_4 = arith.constant 0 : index
    %3 = vector.load %arg3[%c0_3, %c0_4] : memref<1x512xf32, #tpu.memory_space<vmem>>, vector<1x512xf32>
    %4 = vector.broadcast %3 : vector<1x512xf32> to vector<2x512xf32>
    %5 = arith.addf %2, %4 : vector<2x512xf32>
    %cst_5 = arith.constant 0.000000e+00 : f32
    %6 = vector.broadcast %cst_5 : f32 to vector<2x512xf32>
    %7 = arith.maximumf %5, %6 : vector<2x512xf32>
    %c0_6 = arith.constant 0 : index
    %c0_7 = arith.constant 0 : index
    %8 = vector.load %arg4[%c0_6, %c0_7] : memref<512x256xf32, #tpu.memory_space<vmem>>, vector<512x256xf32>
    %cst_8 = arith.constant dense<0.000000e+00> : vector<2x256xf32>
    %9 = tpu.matmul %7, %8, %cst_8 {dimension_numbers = #tpu.dot_dimension_numbers<[1], [0], [0], [1], [0, 0, 1, 1], [], []>} : vector<2x512xf32>, vector<512x256xf32>, vector<2x256xf32> -> vector<2x256xf32>
    %c0_9 = arith.constant 0 : index
    %c0_10 = arith.constant 0 : index
    %10 = vector.load %arg5[%c0_9, %c0_10] : memref<1x256xf32, #tpu.memory_space<vmem>>, vector<1x256xf32>
    %11 = vector.broadcast %10 : vector<1x256xf32> to vector<2x256xf32>
    %12 = arith.addf %9, %11 : vector<2x256xf32>
    %cst_11 = arith.constant 0.000000e+00 : f32
    %13 = vector.broadcast %cst_11 : f32 to vector<2x256xf32>
    %14 = arith.maximumf %12, %13 : vector<2x256xf32>
    %c0_12 = arith.constant 0 : index
    %c0_13 = arith.constant 0 : index
    %15 = vector.load %arg6[%c0_12, %c0_13] : memref<256x128xf32, #tpu.memory_space<vmem>>, vector<256x128xf32>
    %cst_14 = arith.constant dense<0.000000e+00> : vector<2x128xf32>
    %16 = tpu.matmul %14, %15, %cst_14 {dimension_numbers = #tpu.dot_dimension_numbers<[1], [0], [0], [1], [0, 0, 1, 1], [], []>} : vector<2x256xf32>, vector<256x128xf32>, vector<2x128xf32> -> vector<2x128xf32>
    %c0_15 = arith.constant 0 : index
    %c0_16 = arith.constant 0 : index
    %17 = vector.load %arg7[%c0_15, %c0_16] : memref<1x128xf32, #tpu.memory_space<vmem>>, vector<1x128xf32>
    %18 = vector.broadcast %17 : vector<1x128xf32> to vector<2x128xf32>
    %19 = arith.addf %16, %18 : vector<2x128xf32>
    %cst_17 = arith.constant 0.000000e+00 : f32
    %20 = vector.broadcast %cst_17 : f32 to vector<2x128xf32>
    %21 = arith.maximumf %19, %20 : vector<2x128xf32>
    %c0_18 = arith.constant 0 : index
    %c0_19 = arith.constant 0 : index
    %22 = vector.load %arg8[%c0_18, %c0_19] : memref<128x1024xf32, #tpu.memory_space<vmem>>, vector<128x1024xf32>
    %cst_20 = arith.constant dense<0.000000e+00> : vector<2x1024xf32>
    %23 = tpu.matmul %21, %22, %cst_20 {dimension_numbers = #tpu.dot_dimension_numbers<[1], [0], [0], [1], [0, 0, 1, 1], [], []>} : vector<2x128xf32>, vector<128x1024xf32>, vector<2x1024xf32> -> vector<2x1024xf32>
    %c0_21 = arith.constant 0 : index
    %c0_22 = arith.constant 0 : index
    %24 = vector.load %arg9[%c0_21, %c0_22] : memref<1x1024xf32, #tpu.memory_space<vmem>>, vector<1x1024xf32>
    %25 = vector.broadcast %24 : vector<1x1024xf32> to vector<2x1024xf32>
    %26 = arith.addf %23, %25 : vector<2x1024xf32>
    %c0_23 = arith.constant 0 : index
    %c0_24 = arith.constant 0 : index
    %27 = vector.load %arg10[%c0_23, %c0_24] : memref<2x1024xf32, #tpu.memory_space<vmem>>, vector<2x1024xf32>
    tpu.vector_store %arg10[%c0_23, %c0_24], %26 {strides = array<i32>} : memref<2x1024xf32, #tpu.memory_space<vmem>>, vector<2x1024xf32>,
    return
  }
  func.func @transform_0(%arg0: i32) -> (i32, i32) {
    %c0_i32 = arith.constant 0 : i32
    %c0_i32_0 = arith.constant 0 : i32
    return %arg0, %c0_i32 : i32, i32
  }
  func.func @transform_1(%arg0: i32) -> (i32, i32) {
    %c0_i32 = arith.constant 0 : i32
    %c0_i32_0 = arith.constant 0 : i32
    %c0_i32_1 = arith.constant 0 : i32
    return %c0_i32, %c0_i32_0 : i32, i32
  }
  func.func @transform_2(%arg0: i32) -> (i32, i32) {
    %c0_i32 = arith.constant 0 : i32
    %c0_i32_0 = arith.constant 0 : i32
    %c0_i32_1 = arith.constant 0 : i32
    return %c0_i32, %c0_i32_0 : i32, i32
  }
  func.func @transform_3(%arg0: i32) -> (i32, i32) {
    %c0_i32 = arith.constant 0 : i32
    %c0_i32_0 = arith.constant 0 : i32
    %c0_i32_1 = arith.constant 0 : i32
    return %c0_i32, %c0_i32_0 : i32, i32
  }
  func.func @transform_4(%arg0: i32) -> (i32, i32) {
    %c0_i32 = arith.constant 0 : i32
    %c0_i32_0 = arith.constant 0 : i32
    %c0_i32_1 = arith.constant 0 : i32
    return %c0_i32, %c0_i32_0 : i32, i32
  }
  func.func @transform_5(%arg0: i32) -> (i32, i32) {
    %c0_i32 = arith.constant 0 : i32
    %c0_i32_0 = arith.constant 0 : i32
    %c0_i32_1 = arith.constant 0 : i32
    return %c0_i32, %c0_i32_0 : i32, i32
  }
  func.func @transform_6(%arg0: i32) -> (i32, i32) {
    %c0_i32 = arith.constant 0 : i32
    %c0_i32_0 = arith.constant 0 : i32
    %c0_i32_1 = arith.constant 0 : i32
    return %c0_i32, %c0_i32_0 : i32, i32
  }
  func.func @transform_7(%arg0: i32) -> (i32, i32) {
    %c0_i32 = arith.constant 0 : i32
    %c0_i32_0 = arith.constant 0 : i32
    %c0_i32_1 = arith.constant 0 : i32
    return %c0_i32, %c0_i32_0 : i32, i32
  }
  func.func @transform_8(%arg0: i32) -> (i32, i32) {
    %c0_i32 = arith.constant 0 : i32
    %c0_i32_0 = arith.constant 0 : i32
    %c0_i32_1 = arith.constant 0 : i32
    return %c0_i32, %c0_i32_0 : i32, i32
  }
  func.func @transform_9(%arg0: i32) -> (i32, i32) {
    %c0_i32 = arith.constant 0 : i32
    %c0_i32_0 = arith.constant 0 : i32
    return %arg0, %c0_i32 : i32, i32
  }
}

</mosaic_0001>

<llo_original>
// kernel: autoencoder_forward.1
$region0: #{autoencoder_forward.1}
  #allocation0 [shape = 'u32[]', space=smem, size = 0x4, offset = 0x4, fixed_abs, tag = 'smem constant byte address 0x4 - core index']
  #allocation1 [shape = 'u32[144,128]{1,0:T(1,128)}', space=vmem, size = 0x12000, scoped, tag = 'internal scratch']
  %s0 = inlined_call_operand.vmem [shape: f32[2,1024], index: 0, kind: input, shape index: {}]
  %s1 = inlined_call_operand.hbm [shape: f32[1024,512], index: 1, kind: input, shape index: {}]
  %s2 = inlined_call_operand.hbm [shape: f32[1,512], index: 2, kind: input, shape index: {}]
  %s3 = inlined_call_operand.hbm [shape: f32[512,256], index: 3, kind: input, shape index: {}]
  %s4 = inlined_call_operand.hbm [shape: f32[1,256], index: 4, kind: input, shape index: {}]
  %s5 = inlined_call_operand.hbm [shape: f32[256,128], index: 5, kind: input, shape index: {}]
  %s6 = inlined_call_operand.hbm [shape: f32[1,128], index: 6, kind: input, shape index: {}]
  %s7 = inlined_call_operand.hbm [shape: f32[128,1024], index: 7, kind: input, shape index: {}]
  %s8 = inlined_call_operand.hbm [shape: f32[1,1024], index: 8, kind: input, shape index: {}]
  %s9 = inlined_call_operand.vmem [shape: f32[2,1024], index: 9, kind: output, shape index: {}]
  %s10 = sld [smem:[#allocation0]]
  $region78: #{autoencoder_forward.1} parent=0
    _
  %s12 = ssub.s32 1, %s10
  %s13 = scalar_select 0, %s12, %s10
  $region1: #{autoencoder_forward.1} parent=0
    #allocation2 [shape = 'u8[2097152]{0}', space=vmem, size = 0x200000, scoped, tag = 'input window, operand 1, single buffered']
    #allocation3 [shape = 's32[1]{0}', space=sflag, size = 0x4, scoped, tag = 'scoped memory for autoencoder_forward.1']
    #allocation4 [shape = 'u8[2048]{0}', space=vmem, size = 0x800, scoped, tag = 'input window, operand 2, single buffered']
    #allocation5 [shape = 's32[1]{0}', space=sflag, size = 0x4, scoped, tag = 'scoped memory for autoencoder_forward.1']
    #allocation6 [shape = 'u8[524288]{0}', space=vmem, size = 0x80000, scoped, tag = 'input window, operand 3, single buffered']
    #allocation7 [shape = 'u8[1024]{0}', space=vmem, size = 0x400, scoped, tag = 'input window, operand 4, single buffered']
    #allocation8 [shape = 's32[1]{0}', space=sflag, size = 0x4, scoped, tag = 'scoped memory for autoencoder_forward.1']
    #allocation9 [shape = 'u8[131072]{0}', space=vmem, size = 0x20000, scoped, tag = 'input window, operand 5, single buffered']
    #allocation10 [shape = 'u8[512]{0}', space=vmem, size = 0x400, scoped, tag = 'input window, operand 6, single buffered']
    #allocation11 [shape = 's32[1]{0}', space=sflag, size = 0x4, scoped, tag = 'scoped memory for autoencoder_forward.1']
    #allocation12 [shape = 'u8[524288]{0}', space=vmem, size = 0x80000, scoped, tag = 'input window, operand 7, single buffered']
    #allocation13 [shape = 'u8[4096]{0}', space=vmem, size = 0x1000, scoped, tag = 'input window, operand 8, single buffered']
    #allocation14 [shape = 's32[1]{0}', space=sflag, size = 0x4, scoped, tag = 'scoped memory for autoencoder_forward.1']
    %14 = vsyncpa [#allocation3], 0
    %15 = vsyncpa [#allocation5], 0
    %16 = vsyncpa [#allocation8], 0
    %17 = vsyncpa [#allocation11], 0
    %18 = vsyncpa [#allocation14], 0
    // Predicated region
    $region2: #{autoencoder_forward.1} parent=1 // pred_check
      _
    $region3: #{autoencoder_forward.1} parent=1 // pred_check_branch
      %20 = sbr.rel (0) target = $region5
    $region4: #{autoencoder_forward.1} parent=1 // pred_region
      _
    $region5: #{autoencoder_forward.1} parent=1 // pred_fallthru
      _
    // Predicated region
    $region6: #{autoencoder_forward.1} parent=1 // pred_check
      _
    $region7: #{autoencoder_forward.1} parent=1 // pred_check_branch
      %22 = sbr.rel (0) target = $region9
    $region8: #{autoencoder_forward.1} parent=1 // pred_region
      %s24 = ssub.s32 65536, 65536
      %25 = vsyncadd [#allocation3], %s24
      %s26 = sshll.u32 [#allocation2], 4
      %s27 = int_to_ptr.vmem [resolvable:$true] %s26
      %32 = dma.hbm_to_vmem [thread:$0]  %s1, 65536, %s27, [#allocation3], 512, 512, 32
    $region9: #{autoencoder_forward.1} parent=1 // pred_fallthru
      _
    // Predicated region
    $region10: #{autoencoder_forward.1} parent=1 // pred_check
      _
    $region11: #{autoencoder_forward.1} parent=1 // pred_check_branch
      %34 = sbr.rel (0) target = $region13
    $region12: #{autoencoder_forward.1} parent=1 // pred_region
      %s36 = ssub.s32 64, 64
      %37 = vsyncadd [#allocation5], %s36
      %s39 = sshll.u32 [#allocation4], 4
      %s40 = int_to_ptr.vmem [resolvable:$true] %s39
      %42 = dma.hbm_to_vmem [thread:$0]  %s2, 64, %s40, [#allocation5]
    $region13: #{autoencoder_forward.1} parent=1 // pred_fallthru
      _
    // Predicated region
    $region14: #{autoencoder_forward.1} parent=1 // pred_check
      _
    $region15: #{autoencoder_forward.1} parent=1 // pred_check_branch
      %44 = sbr.rel (0) target = $region17
    $region16: #{autoencoder_forward.1} parent=1 // pred_region
      %s46 = ssub.s32 16384, 16384
      %47 = vsyncadd [#allocation5], %s46
      %s48 = sshll.u32 [#allocation6], 4
      %s49 = int_to_ptr.vmem [resolvable:$true] %s48
      %54 = dma.hbm_to_vmem [thread:$0]  %s3, 16384, %s49, [#allocation5], 256, 256, 16
    $region17: #{autoencoder_forward.1} parent=1 // pred_fallthru
      _
    // Predicated region
    $region18: #{autoencoder_forward.1} parent=1 // pred_check
      _
    $region19: #{autoencoder_forward.1} parent=1 // pred_check_branch
      %56 = sbr.rel (0) target = $region21
    $region20: #{autoencoder_forward.1} parent=1 // pred_region
      %s58 = ssub.s32 32, 32
      %59 = vsyncadd [#allocation8], %s58
      %s61 = sshll.u32 [#allocation7], 4
      %s62 = int_to_ptr.vmem [resolvable:$true] %s61
      %64 = dma.hbm_to_vmem [thread:$0]  %s4, 32, %s62, [#allocation8]
    $region21: #{autoencoder_forward.1} parent=1 // pred_fallthru
      _
    // Predicated region
    $region22: #{autoencoder_forward.1} parent=1 // pred_check
      _
    $region23: #{autoencoder_forward.1} parent=1 // pred_check_branch
      %66 = sbr.rel (0) target = $region25
    $region24: #{autoencoder_forward.1} parent=1 // pred_region
      %s68 = ssub.s32 4096, 4096
      %69 = vsyncadd [#allocation8], %s68
      %s70 = sshll.u32 [#allocation9], 4
      %s71 = int_to_ptr.vmem [resolvable:$true] %s70
      %76 = dma.hbm_to_vmem [thread:$0]  %s5, 4096, %s71, [#allocation8], 128, 128, 8
    $region25: #{autoencoder_forward.1} parent=1 // pred_fallthru
      _
    // Predicated region
    $region26: #{autoencoder_forward.1} parent=1 // pred_check
      _
    $region27: #{autoencoder_forward.1} parent=1 // pred_check_branch
      %78 = sbr.rel (0) target = $region29
    $region28: #{autoencoder_forward.1} parent=1 // pred_region
      %s80 = ssub.s32 16, 16
      %81 = vsyncadd [#allocation11], %s80
      %s83 = sshll.u32 [#allocation10], 4
      %s84 = int_to_ptr.vmem [resolvable:$true] %s83
      %86 = dma.hbm_to_vmem [thread:$0]  %s6, 16, %s84, [#allocation11]
    $region29: #{autoencoder_forward.1} parent=1 // pred_fallthru
      _
    // Predicated region
    $region30: #{autoencoder_forward.1} parent=1 // pred_check
      _
    $region31: #{autoencoder_forward.1} parent=1 // pred_check_branch
      %88 = sbr.rel (0) target = $region33
    $region32: #{autoencoder_forward.1} parent=1 // pred_region
      %s90 = ssub.s32 16384, 16384
      %91 = vsyncadd [#allocation11], %s90
      %s92 = sshll.u32 [#allocation12], 4
      %s93 = int_to_ptr.vmem [resolvable:$true] %s92
      %98 = dma.hbm_to_vmem [thread:$0]  %s7, 16384, %s93, [#allocation11], 1024, 1024, 64
    $region33: #{autoencoder_forward.1} parent=1 // pred_fallthru
      _
    // Predicated region
    $region34: #{autoencoder_forward.1} parent=1 // pred_check
      _
    $region35: #{autoencoder_forward.1} parent=1 // pred_check_branch
      %100 = sbr.rel (0) target = $region37
    $region36: #{autoencoder_forward.1} parent=1 // pred_region
      %s102 = ssub.s32 128, 128
      %103 = vsyncadd [#allocation14], %s102
      %s105 = sshll.u32 [#allocation13], 4
      %s106 = int_to_ptr.vmem [resolvable:$true] %s105
      %108 = dma.hbm_to_vmem [thread:$0]  %s8, 128, %s106, [#allocation14]
    $region37: #{autoencoder_forward.1} parent=1 // pred_fallthru
      _
    // Predicated region
    $region38: #{autoencoder_forward.1} parent=1 // pred_check
      _
    $region39: #{autoencoder_forward.1} parent=1 // pred_check_branch
      %110 = sbr.rel (0) target = $region41
    $region40: #{autoencoder_forward.1} parent=1 // pred_region
      %111 = dma.done [#allocation3], 65536
    $region41: #{autoencoder_forward.1} parent=1 // pred_fallthru
      _
    // Predicated region
    $region42: #{autoencoder_forward.1} parent=1 // pred_check
      _
    $region43: #{autoencoder_forward.1} parent=1 // pred_check_branch
      %113 = sbr.rel (0) target = $region45
    $region44: #{autoencoder_forward.1} parent=1 // pred_region
      %114 = dma.done [#allocation5], 64
    $region45: #{autoencoder_forward.1} parent=1 // pred_fallthru
      _
    // Predicated region
    $region46: #{autoencoder_forward.1} parent=1 // pred_check
      _
    $region47: #{autoencoder_forward.1} parent=1 // pred_check_branch
      %116 = sbr.rel (0) target = $region49
    $region48: #{autoencoder_forward.1} parent=1 // pred_region
      %117 = dma.done [#allocation5], 16384
    $region49: #{autoencoder_forward.1} parent=1 // pred_fallthru
      _
    // Predicated region
    $region50: #{autoencoder_forward.1} parent=1 // pred_check
      _
    $region51: #{autoencoder_forward.1} parent=1 // pred_check_branch
      %119 = sbr.rel (0) target = $region53
    $region52: #{autoencoder_forward.1} parent=1 // pred_region
      %120 = dma.done [#allocation8], 32
    $region53: #{autoencoder_forward.1} parent=1 // pred_fallthru
      _
    // Predicated region
    $region54: #{autoencoder_forward.1} parent=1 // pred_check
      _
    $region55: #{autoencoder_forward.1} parent=1 // pred_check_branch
      %122 = sbr.rel (0) target = $region57
    $region56: #{autoencoder_forward.1} parent=1 // pred_region
      %123 = dma.done [#allocation8], 4096
    $region57: #{autoencoder_forward.1} parent=1 // pred_fallthru
      _
    // Predicated region
    $region58: #{autoencoder_forward.1} parent=1 // pred_check
      _
    $region59: #{autoencoder_forward.1} parent=1 // pred_check_branch
      %125 = sbr.rel (0) target = $region61
    $region60: #{autoencoder_forward.1} parent=1 // pred_region
      %126 = dma.done [#allocation11], 16
    $region61: #{autoencoder_forward.1} parent=1 // pred_fallthru
      _
    // Predicated region
    $region62: #{autoencoder_forward.1} parent=1 // pred_check
      _
    $region63: #{autoencoder_forward.1} parent=1 // pred_check_branch
      %128 = sbr.rel (0) target = $region65
    $region64: #{autoencoder_forward.1} parent=1 // pred_region
      %129 = dma.done [#allocation11], 16384
    $region65: #{autoencoder_forward.1} parent=1 // pred_fallthru
      _
    // Predicated region
    $region66: #{autoencoder_forward.1} parent=1 // pred_check
      _
    $region67: #{autoencoder_forward.1} parent=1 // pred_check_branch
      %131 = sbr.rel (0) target = $region69
    $region68: #{autoencoder_forward.1} parent=1 // pred_region
      %132 = dma.done [#allocation14], 128
    $region69: #{autoencoder_forward.1} parent=1 // pred_fallthru
      _
    %v133 = vld [vmem:[%s0] sm:$0xff]
    %v134 = vld [vmem:[%s0 + $0x8] sm:$0xff]
    %v135 = vld [vmem:[#allocation2] sm:$0xff]
    %v136 = vld [vmem:[#allocation2 + $0x8] sm:$0xff]
    %v137 = vld [vmem:[#allocation2 + $0x10] sm:$0xff]
    %v138 = vld [vmem:[#allocation2 + $0x18] sm:$0xff]
    %v139 = vld [vmem:[#allocation2 + $0x20] sm:$0xff]
    %v140 = vld [vmem:[#allocation2 + $0x28] sm:$0xff]
    %v141 = vld [vmem:[#allocation2 + $0x30] sm:$0xff]
    %v142 = vld [vmem:[#allocation2 + $0x38] sm:$0xff]
    %v143 = vld [vmem:[#allocation2 + $0x40] sm:$0xff]
    %v144 = vld [vmem:[#allocation2 + $0x48] sm:$0xff]
    %v145 = vld [vmem:[#allocation2 + $0x50] sm:$0xff]
    %v146 = vld [vmem:[#allocation2 + $0x58] sm:$0xff]
    %v147 = vld [vmem:[#allocation2 + $0x60] sm:$0xff]
    %v148 = vld [vmem:[#allocation2 + $0x68] sm:$0xff]
    %v149 = vld [vmem:[#allocation2 + $0x70] sm:$0xff]
    %v150 = vld [vmem:[#allocation2 + $0x78] sm:$0xff]
    %v151 = vld [vmem:[#allocation2 + $0x80] sm:$0xff]
    %v152 = vld [vmem:[#allocation2 + $0x88] sm:$0xff]
    %v153 = vld [vmem:[#allocation2 + $0x90] sm:$0xff]
    %v154 = vld [vmem:[#allocation2 + $0x98] sm:$0xff]
    %v155 = vld [vmem:[#allocation2 + $0xa0] sm:$0xff]
    %v156 = vld [vmem:[#allocation2 + $0xa8] sm:$0xff]
    %v157 = vld [vmem:[#allocation2 + $0xb0] sm:$0xff]
    %v158 = vld [vmem:[#allocation2 + $0xb8] sm:$0xff]
    %v159 = vld [vmem:[#allocation2 + $0xc0] sm:$0xff]
    %v160 = vld [vmem:[#allocation2 + $0xc8] sm:$0xff]
    %v161 = vld [vmem:[#allocation2 + $0xd0] sm:$0xff]
    %v162 = vld [vmem:[#allocation2 + $0xd8] sm:$0xff]
    %v163 = vld [vmem:[#allocation2 + $0xe0] sm:$0xff]
    %v164 = vld [vmem:[#allocation2 + $0xe8] sm:$0xff]
    %v165 = vld [vmem:[#allocation2 + $0xf0] sm:$0xff]
    %v166 = vld [vmem:[#allocation2 + $0xf8] sm:$0xff]
    %v167 = vld [vmem:[#allocation2 + $0x100] sm:$0xff]
    %v168 = vld [vmem:[#allocation2 + $0x108] sm:$0xff]
    %v169 = vld [vmem:[#allocation2 + $0x110] sm:$0xff]
    %v170 = vld [vmem:[#allocation2 + $0x118] sm:$0xff]
    %v171 = vld [vmem:[#allocation2 + $0x120] sm:$0xff]
    %v172 = vld [vmem:[#allocation2 + $0x128] sm:$0xff]
    %v173 = vld [vmem:[#allocation2 + $0x130] sm:$0xff]
    %v174 = vld [vmem:[#allocation2 + $0x138] sm:$0xff]
    %v175 = vld [vmem:[#allocation2 + $0x140] sm:$0xff]
    %v176 = vld [vmem:[#allocation2 + $0x148] sm:$0xff]
    %v177 = vld [vmem:[#allocation2 + $0x150] sm:$0xff]
    %v178 = vld [vmem:[#allocation2 + $0x158] sm:$0xff]
    %v179 = vld [vmem:[#allocation2 + $0x160] sm:$0xff]
    %v180 = vld [vmem:[#allocation2 + $0x168] sm:$0xff]
    %v181 = vld [vmem:[#allocation2 + $0x170] sm:$0xff]
    %v182 = vld [vmem:[#allocation2 + $0x178] sm:$0xff]
    %v183 = vld [vmem:[#allocation2 + $0x180] sm:$0xff]
    %v184 = vld [vmem:[#allocation2 + $0x188] sm:$0xff]
    %v185 = vld [vmem:[#allocation2 + $0x190] sm:$0xff]
    %v186 = vld [vmem:[#allocation2 + $0x198] sm:$0xff]
    %v187 = vld [vmem:[#allocation2 + $0x1a0] sm:$0xff]
    %v188 = vld [vmem:[#allocation2 + $0x1a8] sm:$0xff]
    %v189 = vld [vmem:[#allocation2 + $0x1b0] sm:$0xff]
    %v190 = vld [vmem:[#allocation2 + $0x1b8] sm:$0xff]
    %v191 = vld [vmem:[#allocation2 + $0x1c0] sm:$0xff]
    %v192 = vld [vmem:[#allocation2 + $0x1c8] sm:$0xff]
    %v193 = vld [vmem:[#allocation2 + $0x1d0] sm:$0xff]
    %v194 = vld [vmem:[#allocation2 + $0x1d8] sm:$0xff]
    %v195 = vld [vmem:[#allocation2 + $0x1e0] sm:$0xff]
    %v196 = vld [vmem:[#allocation2 + $0x1e8] sm:$0xff]
    %v197 = vld [vmem:[#allocation2 + $0x1f0] sm:$0xff]
    %v198 = vld [vmem:[#allocation2 + $0x1f8] sm:$0xff]
    %v199 = vld [vmem:[#allocation2 + $0x200] sm:$0xff]
    %v200 = vld [vmem:[#allocation2 + $0x208] sm:$0xff]
    %v201 = vld [vmem:[#allocation2 + $0x210] sm:$0xff]
    %v202 = vld [vmem:[#allocation2 + $0x218] sm:$0xff]
    %v203 = vld [vmem:[#allocation2 + $0x220] sm:$0xff]
    %v204 = vld [vmem:[#allocation2 + $0x228] sm:$0xff]
    %v205 = vld [vmem:[#allocation2 + $0x230] sm:$0xff]
    %v206 = vld [vmem:[#allocation2 + $0x238] sm:$0xff]
    %v207 = vld [vmem:[#allocation2 + $0x240] sm:$0xff]
    %v208 = vld [vmem:[#allocation2 + $0x248] sm:$0xff]
    %v209 = vld [vmem:[#allocation2 + $0x250] sm:$0xff]
    %v210 = vld [vmem:[#allocation2 + $0x258] sm:$0xff]
    %v211 = vld [vmem:[#allocation2 + $0x260] sm:$0xff]
    %v212 = vld [vmem:[#allocation2 + $0x268] sm:$0xff]
    %v213 = vld [vmem:[#allocation2 + $0x270] sm:$0xff]
    %v214 = vld [vmem:[#allocation2 + $0x278] sm:$0xff]
    %v215 = vld [vmem:[#allocation2 + $0x280] sm:$0xff]
    %v216 = vld [vmem:[#allocation2 + $0x288] sm:$0xff]
    %v217 = vld [vmem:[#allocation2 + $0x290] sm:$0xff]
    %v218 = vld [vmem:[#allocation2 + $0x298] sm:$0xff]
    %v219 = vld [vmem:[#allocation2 + $0x2a0] sm:$0xff]
    %v220 = vld [vmem:[#allocation2 + $0x2a8] sm:$0xff]
    %v221 = vld [vmem:[#allocation2 + $0x2b0] sm:$0xff]
    %v222 = vld [vmem:[#allocation2 + $0x2b8] sm:$0xff]
    %v223 = vld [vmem:[#allocation2 + $0x2c0] sm:$0xff]
    %v224 = vld [vmem:[#allocation2 + $0x2c8] sm:$0xff]
    %v225 = vld [vmem:[#allocation2 + $0x2d0] sm:$0xff]
    %v226 = vld [vmem:[#allocation2 + $0x2d8] sm:$0xff]
    %v227 = vld [vmem:[#allocation2 + $0x2e0] sm:$0xff]
    %v228 = vld [vmem:[#allocation2 + $0x2e8] sm:$0xff]
    %v229 = vld [vmem:[#allocation2 + $0x2f0] sm:$0xff]
    %v230 = vld [vmem:[#allocation2 + $0x2f8] sm:$0xff]
    %v231 = vld [vmem:[#allocation2 + $0x300] sm:$0xff]
    %v232 = vld [vmem:[#allocation2 + $0x308] sm:$0xff]
    %v233 = vld [vmem:[#allocation2 + $0x310] sm:$0xff]
    %v234 = vld [vmem:[#allocation2 + $0x318] sm:$0xff]
    %v235 = vld [vmem:[#allocation2 + $0x320] sm:$0xff]
    %v236 = vld [vmem:[#allocation2 + $0x328] sm:$0xff]
    %v237 = vld [vmem:[#allocation2 + $0x330] sm:$0xff]
    %v238 = vld [vmem:[#allocation2 + $0x338] sm:$0xff]
    %v239 = vld [vmem:[#allocation2 + $0x340] sm:$0xff]
    %v240 = vld [vmem:[#allocation2 + $0x348] sm:$0xff]
    %v241 = vld [vmem:[#allocation2 + $0x350] sm:$0xff]
    %v242 = vld [vmem:[#allocation2 + $0x358] sm:$0xff]
    %v243 = vld [vmem:[#allocation2 + $0x360] sm:$0xff]
    %v244 = vld [vmem:[#allocation2 + $0x368] sm:$0xff]
    %v245 = vld [vmem:[#allocation2 + $0x370] sm:$0xff]
    %v246 = vld [vmem:[#allocation2 + $0x378] sm:$0xff]
    %v247 = vld [vmem:[#allocation2 + $0x380] sm:$0xff]
    %v248 = vld [vmem:[#allocation2 + $0x388] sm:$0xff]
    %v249 = vld [vmem:[#allocation2 + $0x390] sm:$0xff]
    %v250 = vld [vmem:[#allocation2 + $0x398] sm:$0xff]
    %v251 = vld [vmem:[#allocation2 + $0x3a0] sm:$0xff]
    %v252 = vld [vmem:[#allocation2 + $0x3a8] sm:$0xff]
    %v253 = vld [vmem:[#allocation2 + $0x3b0] sm:$0xff]
    %v254 = vld [vmem:[#allocation2 + $0x3b8] sm:$0xff]
    %v255 = vld [vmem:[#allocation2 + $0x3c0] sm:$0xff]
    %v256 = vld [vmem:[#allocation2 + $0x3c8] sm:$0xff]
    %v257 = vld [vmem:[#allocation2 + $0x3d0] sm:$0xff]
    %v258 = vld [vmem:[#allocation2 + $0x3d8] sm:$0xff]
    %v259 = vld [vmem:[#allocation2 + $0x3e0] sm:$0xff]
    %v260 = vld [vmem:[#allocation2 + $0x3e8] sm:$0xff]
    %v261 = vld [vmem:[#allocation2 + $0x3f0] sm:$0xff]
    %v262 = vld [vmem:[#allocation2 + $0x3f8] sm:$0xff]
    %v263 = vld [vmem:[#allocation2 + $0x400] sm:$0xff]
    %v264 = vld [vmem:[#allocation2 + $0x408] sm:$0xff]
    %v265 = vld [vmem:[#allocation2 + $0x410] sm:$0xff]
    %v266 = vld [vmem:[#allocation2 + $0x418] sm:$0xff]
    %v267 = vld [vmem:[#allocation2 + $0x420] sm:$0xff]
    %v268 = vld [vmem:[#allocation2 + $0x428] sm:$0xff]
    %v269 = vld [vmem:[#allocation2 + $0x430] sm:$0xff]
    %v270 = vld [vmem:[#allocation2 + $0x438] sm:$0xff]
    %v271 = vld [vmem:[#allocation2 + $0x440] sm:$0xff]
    %v272 = vld [vmem:[#allocation2 + $0x448] sm:$0xff]
    %v273 = vld [vmem:[#allocation2 + $0x450] sm:$0xff]
    %v274 = vld [vmem:[#allocation2 + $0x458] sm:$0xff]
    %v275 = vld [vmem:[#allocation2 + $0x460] sm:$0xff]
    %v276 = vld [vmem:[#allocation2 + $0x468] sm:$0xff]
    %v277 = vld [vmem:[#allocation2 + $0x470] sm:$0xff]
    %v278 = vld [vmem:[#allocation2 + $0x478] sm:$0xff]
    %v279 = vld [vmem:[#allocation2 + $0x480] sm:$0xff]
    %v280 = vld [vmem:[#allocation2 + $0x488] sm:$0xff]
    %v281 = vld [vmem:[#allocation2 + $0x490] sm:$0xff]
    %v282 = vld [vmem:[#allocation2 + $0x498] sm:$0xff]
    %v283 = vld [vmem:[#allocation2 + $0x4a0] sm:$0xff]
    %v284 = vld [vmem:[#allocation2 + $0x4a8] sm:$0xff]
    %v285 = vld [vmem:[#allocation2 + $0x4b0] sm:$0xff]
    %v286 = vld [vmem:[#allocation2 + $0x4b8] sm:$0xff]
    %v287 = vld [vmem:[#allocation2 + $0x4c0] sm:$0xff]
    %v288 = vld [vmem:[#allocation2 + $0x4c8] sm:$0xff]
    %v289 = vld [vmem:[#allocation2 + $0x4d0] sm:$0xff]
    %v290 = vld [vmem:[#allocation2 + $0x4d8] sm:$0xff]
    %v291 = vld [vmem:[#allocation2 + $0x4e0] sm:$0xff]
    %v292 = vld [vmem:[#allocation2 + $0x4e8] sm:$0xff]
    %v293 = vld [vmem:[#allocation2 + $0x4f0] sm:$0xff]
    %v294 = vld [vmem:[#allocation2 + $0x4f8] sm:$0xff]
    %v295 = vld [vmem:[#allocation2 + $0x500] sm:$0xff]
    %v296 = vld [vmem:[#allocation2 + $0x508] sm:$0xff]
    %v297 = vld [vmem:[#allocation2 + $0x510] sm:$0xff]
    %v298 = vld [vmem:[#allocation2 + $0x518] sm:$0xff]
    %v299 = vld [vmem:[#allocation2 + $0x520] sm:$0xff]
    %v300 = vld [vmem:[#allocation2 + $0x528] sm:$0xff]
    %v301 = vld [vmem:[#allocation2 + $0x530] sm:$0xff]
    %v302 = vld [vmem:[#allocation2 + $0x538] sm:$0xff]
    %v303 = vld [vmem:[#allocation2 + $0x540] sm:$0xff]
    %v304 = vld [vmem:[#allocation2 + $0x548] sm:$0xff]
    %v305 = vld [vmem:[#allocation2 + $0x550] sm:$0xff]
    %v306 = vld [vmem:[#allocation2 + $0x558] sm:$0xff]
    %v307 = vld [vmem:[#allocation2 + $0x560] sm:$0xff]
    %v308 = vld [vmem:[#allocation2 + $0x568] sm:$0xff]
    %v309 = vld [vmem:[#allocation2 + $0x570] sm:$0xff]
    %v310 = vld [vmem:[#allocation2 + $0x578] sm:$0xff]
    %v311 = vld [vmem:[#allocation2 + $0x580] sm:$0xff]
    %v312 = vld [vmem:[#allocation2 + $0x588] sm:$0xff]
    %v313 = vld [vmem:[#allocation2 + $0x590] sm:$0xff]
    %v314 = vld [vmem:[#allocation2 + $0x598] sm:$0xff]
    %v315 = vld [vmem:[#allocation2 + $0x5a0] sm:$0xff]
    %v316 = vld [vmem:[#allocation2 + $0x5a8] sm:$0xff]
    %v317 = vld [vmem:[#allocation2 + $0x5b0] sm:$0xff]
    %v318 = vld [vmem:[#allocation2 + $0x5b8] sm:$0xff]
    %v319 = vld [vmem:[#allocation2 + $0x5c0] sm:$0xff]
    %v320 = vld [vmem:[#allocation2 + $0x5c8] sm:$0xff]
    %v321 = vld [vmem:[#allocation2 + $0x5d0] sm:$0xff]
    %v322 = vld [vmem:[#allocation2 + $0x5d8] sm:$0xff]
    %v323 = vld [vmem:[#allocation2 + $0x5e0] sm:$0xff]
    %v324 = vld [vmem:[#allocation2 + $0x5e8] sm:$0xff]
    %v325 = vld [vmem:[#allocation2 + $0x5f0] sm:$0xff]
    %v326 = vld [vmem:[#allocation2 + $0x5f8] sm:$0xff]
    %v327 = vld [vmem:[#allocation2 + $0x600] sm:$0xff]
    %v328 = vld [vmem:[#allocation2 + $0x608] sm:$0xff]
    %v329 = vld [vmem:[#allocation2 + $0x610] sm:$0xff]
    %v330 = vld [vmem:[#allocation2 + $0x618] sm:$0xff]
    %v331 = vld [vmem:[#allocation2 + $0x620] sm:$0xff]
    %v332 = vld [vmem:[#allocation2 + $0x628] sm:$0xff]
    %v333 = vld [vmem:[#allocation2 + $0x630] sm:$0xff]
    %v334 = vld [vmem:[#allocation2 + $0x638] sm:$0xff]
    %v335 = vld [vmem:[#allocation2 + $0x640] sm:$0xff]
    %v336 = vld [vmem:[#allocation2 + $0x648] sm:$0xff]
    %v337 = vld [vmem:[#allocation2 + $0x650] sm:$0xff]
    %v338 = vld [vmem:[#allocation2 + $0x658] sm:$0xff]
    %v339 = vld [vmem:[#allocation2 + $0x660] sm:$0xff]
    %v340 = vld [vmem:[#allocation2 + $0x668] sm:$0xff]
    %v341 = vld [vmem:[#allocation2 + $0x670] sm:$0xff]
    %v342 = vld [vmem:[#allocation2 + $0x678] sm:$0xff]
    %v343 = vld [vmem:[#allocation2 + $0x680] sm:$0xff]
    %v344 = vld [vmem:[#allocation2 + $0x688] sm:$0xff]
    %v345 = vld [vmem:[#allocation2 + $0x690] sm:$0xff]
    %v346 = vld [vmem:[#allocation2 + $0x698] sm:$0xff]
    %v347 = vld [vmem:[#allocation2 + $0x6a0] sm:$0xff]
    %v348 = vld [vmem:[#allocation2 + $0x6a8] sm:$0xff]
    %v349 = vld [vmem:[#allocation2 + $0x6b0] sm:$0xff]
    %v350 = vld [vmem:[#allocation2 + $0x6b8] sm:$0xff]
    %v351 = vld [vmem:[#allocation2 + $0x6c0] sm:$0xff]
    %v352 = vld [vmem:[#allocation2 + $0x6c8] sm:$0xff]
    %v353 = vld [vmem:[#allocation2 + $0x6d0] sm:$0xff]
    %v354 = vld [vmem:[#allocation2 + $0x6d8] sm:$0xff]
    %v355 = vld [vmem:[#allocation2 + $0x6e0] sm:$0xff]
    %v356 = vld [vmem:[#allocation2 + $0x6e8] sm:$0xff]
    %v357 = vld [vmem:[#allocation2 + $0x6f0] sm:$0xff]
    %v358 = vld [vmem:[#allocation2 + $0x6f8] sm:$0xff]
    %v359 = vld [vmem:[#allocation2 + $0x700] sm:$0xff]
    %v360 = vld [vmem:[#allocation2 + $0x708] sm:$0xff]
    %v361 = vld [vmem:[#allocation2 + $0x710] sm:$0xff]
    %v362 = vld [vmem:[#allocation2 + $0x718] sm:$0xff]
    %v363 = vld [vmem:[#allocation2 + $0x720] sm:$0xff]
    %v364 = vld [vmem:[#allocation2 + $0x728] sm:$0xff]
    %v365 = vld [vmem:[#allocation2 + $0x730] sm:$0xff]
    %v366 = vld [vmem:[#allocation2 + $0x738] sm:$0xff]
    %v367 = vld [vmem:[#allocation2 + $0x740] sm:$0xff]
    %v368 = vld [vmem:[#allocation2 + $0x748] sm:$0xff]
    %v369 = vld [vmem:[#allocation2 + $0x750] sm:$0xff]
    %v370 = vld [vmem:[#allocation2 + $0x758] sm:$0xff]
    %v371 = vld [vmem:[#allocation2 + $0x760] sm:$0xff]
    %v372 = vld [vmem:[#allocation2 + $0x768] sm:$0xff]
    %v373 = vld [vmem:[#allocation2 + $0x770] sm:$0xff]
    %v374 = vld [vmem:[#allocation2 + $0x778] sm:$0xff]
    %v375 = vld [vmem:[#allocation2 + $0x780] sm:$0xff]
    %v376 = vld [vmem:[#allocation2 + $0x788] sm:$0xff]
    %v377 = vld [vmem:[#allocation2 + $0x790] sm:$0xff]
    %v378 = vld [vmem:[#allocation2 + $0x798] sm:$0xff]
    %v379 = vld [vmem:[#allocation2 + $0x7a0] sm:$0xff]
    %v380 = vld [vmem:[#allocation2 + $0x7a8] sm:$0xff]
    %v381 = vld [vmem:[#allocation2 + $0x7b0] sm:$0xff]
    %v382 = vld [vmem:[#allocation2 + $0x7b8] sm:$0xff]
    %v383 = vld [vmem:[#allocation2 + $0x7c0] sm:$0xff]
    %v384 = vld [vmem:[#allocation2 + $0x7c8] sm:$0xff]
    %v385 = vld [vmem:[#allocation2 + $0x7d0] sm:$0xff]
    %v386 = vld [vmem:[#allocation2 + $0x7d8] sm:$0xff]
    %v387 = vld [vmem:[#allocation2 + $0x7e0] sm:$0xff]
    %v388 = vld [vmem:[#allocation2 + $0x7e8] sm:$0xff]
    %v389 = vld [vmem:[#allocation2 + $0x7f0] sm:$0xff]
    %v390 = vld [vmem:[#allocation2 + $0x7f8] sm:$0xff]
    %v391 = vld [vmem:[#allocation2 + $0x800] sm:$0xff]
    %v392 = vld [vmem:[#allocation2 + $0x808] sm:$0xff]
    %v393 = vld [vmem:[#allocation2 + $0x810] sm:$0xff]
    %v394 = vld [vmem:[#allocation2 + $0x818] sm:$0xff]
    %v395 = vld [vmem:[#allocation2 + $0x820] sm:$0xff]
    %v396 = vld [vmem:[#allocation2 + $0x828] sm:$0xff]
    %v397 = vld [vmem:[#allocation2 + $0x830] sm:$0xff]
    %v398 = vld [vmem:[#allocation2 + $0x838] sm:$0xff]
    %v399 = vld [vmem:[#allocation2 + $0x840] sm:$0xff]
    %v400 = vld [vmem:[#allocation2 + $0x848] sm:$0xff]
    %v401 = vld [vmem:[#allocation2 + $0x850] sm:$0xff]
    %v402 = vld [vmem:[#allocation2 + $0x858] sm:$0xff]
    %v403 = vld [vmem:[#allocation2 + $0x860] sm:$0xff]
    %v404 = vld [vmem:[#allocation2 + $0x868] sm:$0xff]
    %v405 = vld [vmem:[#allocation2 + $0x870] sm:$0xff]
    %v406 = vld [vmem:[#allocation2 + $0x878] sm:$0xff]
    %v407 = vld [vmem:[#allocation2 + $0x880] sm:$0xff]
    %v408 = vld [vmem:[#allocation2 + $0x888] sm:$0xff]
    %v409 = vld [vmem:[#allocation2 + $0x890] sm:$0xff]
    %v410 = vld [vmem:[#allocation2 + $0x898] sm:$0xff]
    %v411 = vld [vmem:[#allocation2 + $0x8a0] sm:$0xff]
    %v412 = vld [vmem:[#allocation2 + $0x8a8] sm:$0xff]
    %v413 = vld [vmem:[#allocation2 + $0x8b0] sm:$0xff]
    %v414 = vld [vmem:[#allocation2 + $0x8b8] sm:$0xff]
    %v415 = vld [vmem:[#allocation2 + $0x8c0] sm:$0xff]
    %v416 = vld [vmem:[#allocation2 + $0x8c8] sm:$0xff]
    %v417 = vld [vmem:[#allocation2 + $0x8d0] sm:$0xff]
    %v418 = vld [vmem:[#allocation2 + $0x8d8] sm:$0xff]
    %v419 = vld [vmem:[#allocation2 + $0x8e0] sm:$0xff]
    %v420 = vld [vmem:[#allocation2 + $0x8e8] sm:$0xff]
    %v421 = vld [vmem:[#allocation2 + $0x8f0] sm:$0xff]
    %v422 = vld [vmem:[#allocation2 + $0x8f8] sm:$0xff]
    %v423 = vld [vmem:[#allocation2 + $0x900] sm:$0xff]
    %v424 = vld [vmem:[#allocation2 + $0x908] sm:$0xff]
    %v425 = vld [vmem:[#allocation2 + $0x910] sm:$0xff]
    %v426 = vld [vmem:[#allocation2 + $0x918] sm:$0xff]
    %v427 = vld [vmem:[#allocation2 + $0x920] sm:$0xff]
    %v428 = vld [vmem:[#allocation2 + $0x928] sm:$0xff]
    %v429 = vld [vmem:[#allocation2 + $0x930] sm:$0xff]
    %v430 = vld [vmem:[#allocation2 + $0x938] sm:$0xff]
    %v431 = vld [vmem:[#allocation2 + $0x940] sm:$0xff]
    %v432 = vld [vmem:[#allocation2 + $0x948] sm:$0xff]
    %v433 = vld [vmem:[#allocation2 + $0x950] sm:$0xff]
    %v434 = vld [vmem:[#allocation2 + $0x958] sm:$0xff]
    %v435 = vld [vmem:[#allocation2 + $0x960] sm:$0xff]
    %v436 = vld [vmem:[#allocation2 + $0x968] sm:$0xff]
    %v437 = vld [vmem:[#allocation2 + $0x970] sm:$0xff]
    %v438 = vld [vmem:[#allocation2 + $0x978] sm:$0xff]
    %v439 = vld [vmem:[#allocation2 + $0x980] sm:$0xff]
    %v440 = vld [vmem:[#allocation2 + $0x988] sm:$0xff]
    %v441 = vld [vmem:[#allocation2 + $0x990] sm:$0xff]
    %v442 = vld [vmem:[#allocation2 + $0x998] sm:$0xff]
    %v443 = vld [vmem:[#allocation2 + $0x9a0] sm:$0xff]
    %v444 = vld [vmem:[#allocation2 + $0x9a8] sm:$0xff]
    %v445 = vld [vmem:[#allocation2 + $0x9b0] sm:$0xff]
    %v446 = vld [vmem:[#allocation2 + $0x9b8] sm:$0xff]
    %v447 = vld [vmem:[#allocation2 + $0x9c0] sm:$0xff]
    %v448 = vld [vmem:[#allocation2 + $0x9c8] sm:$0xff]
    %v449 = vld [vmem:[#allocation2 + $0x9d0] sm:$0xff]
    %v450 = vld [vmem:[#allocation2 + $0x9d8] sm:$0xff]
    %v451 = vld [vmem:[#allocation2 + $0x9e0] sm:$0xff]
    %v452 = vld [vmem:[#allocation2 + $0x9e8] sm:$0xff]
    %v453 = vld [vmem:[#allocation2 + $0x9f0] sm:$0xff]
    %v454 = vld [vmem:[#allocation2 + $0x9f8] sm:$0xff]
    %v455 = vld [vmem:[#allocation2 + $0xa00] sm:$0xff]
    %v456 = vld [vmem:[#allocation2 + $0xa08] sm:$0xff]
    %v457 = vld [vmem:[#allocation2 + $0xa10] sm:$0xff]
    %v458 = vld [vmem:[#allocation2 + $0xa18] sm:$0xff]
    %v459 = vld [vmem:[#allocation2 + $0xa20] sm:$0xff]
    %v460 = vld [vmem:[#allocation2 + $0xa28] sm:$0xff]
    %v461 = vld [vmem:[#allocation2 + $0xa30] sm:$0xff]
    %v462 = vld [vmem:[#allocation2 + $0xa38] sm:$0xff]
    %v463 = vld [vmem:[#allocation2 + $0xa40] sm:$0xff]
    %v464 = vld [vmem:[#allocation2 + $0xa48] sm:$0xff]
    %v465 = vld [vmem:[#allocation2 + $0xa50] sm:$0xff]
    %v466 = vld [vmem:[#allocation2 + $0xa58] sm:$0xff]
    %v467 = vld [vmem:[#allocation2 + $0xa60] sm:$0xff]
    %v468 = vld [vmem:[#allocation2 + $0xa68] sm:$0xff]
    %v469 = vld [vmem:[#allocation2 + $0xa70] sm:$0xff]
    %v470 = vld [vmem:[#allocation2 + $0xa78] sm:$0xff]
    %v471 = vld [vmem:[#allocation2 + $0xa80] sm:$0xff]
    %v472 = vld [vmem:[#allocation2 + $0xa88] sm:$0xff]
    %v473 = vld [vmem:[#allocation2 + $0xa90] sm:$0xff]
    %v474 = vld [vmem:[#allocation2 + $0xa98] sm:$0xff]
    %v475 = vld [vmem:[#allocation2 + $0xaa0] sm:$0xff]
    %v476 = vld [vmem:[#allocation2 + $0xaa8] sm:$0xff]
    %v477 = vld [vmem:[#allocation2 + $0xab0] sm:$0xff]
    %v478 = vld [vmem:[#allocation2 + $0xab8] sm:$0xff]
    %v479 = vld [vmem:[#allocation2 + $0xac0] sm:$0xff]
    %v480 = vld [vmem:[#allocation2 + $0xac8] sm:$0xff]
    %v481 = vld [vmem:[#allocation2 + $0xad0] sm:$0xff]
    %v482 = vld [vmem:[#allocation2 + $0xad8] sm:$0xff]
    %v483 = vld [vmem:[#allocation2 + $0xae0] sm:$0xff]
    %v484 = vld [vmem:[#allocation2 + $0xae8] sm:$0xff]
    %v485 = vld [vmem:[#allocation2 + $0xaf0] sm:$0xff]
    %v486 = vld [vmem:[#allocation2 + $0xaf8] sm:$0xff]
    %v487 = vld [vmem:[#allocation2 + $0xb00] sm:$0xff]
    %v488 = vld [vmem:[#allocation2 + $0xb08] sm:$0xff]
    %v489 = vld [vmem:[#allocation2 + $0xb10] sm:$0xff]
    %v490 = vld [vmem:[#allocation2 + $0xb18] sm:$0xff]
    %v491 = vld [vmem:[#allocation2 + $0xb20] sm:$0xff]
    %v492 = vld [vmem:[#allocation2 + $0xb28] sm:$0xff]
    %v493 = vld [vmem:[#allocation2 + $0xb30] sm:$0xff]
    %v494 = vld [vmem:[#allocation2 + $0xb38] sm:$0xff]
    %v495 = vld [vmem:[#allocation2 + $0xb40] sm:$0xff]
    %v496 = vld [vmem:[#allocation2 + $0xb48] sm:$0xff]
    %v497 = vld [vmem:[#allocation2 + $0xb50] sm:$0xff]
    %v498 = vld [vmem:[#allocation2 + $0xb58] sm:$0xff]
    %v499 = vld [vmem:[#allocation2 + $0xb60] sm:$0xff]
    %v500 = vld [vmem:[#allocation2 + $0xb68] sm:$0xff]
    %v501 = vld [vmem:[#allocation2 + $0xb70] sm:$0xff]
    %v502 = vld [vmem:[#allocation2 + $0xb78] sm:$0xff]
    %v503 = vld [vmem:[#allocation2 + $0xb80] sm:$0xff]
    %v504 = vld [vmem:[#allocation2 + $0xb88] sm:$0xff]
    %v505 = vld [vmem:[#allocation2 + $0xb90] sm:$0xff]
    %v506 = vld [vmem:[#allocation2 + $0xb98] sm:$0xff]
    %v507 = vld [vmem:[#allocation2 + $0xba0] sm:$0xff]
    %v508 = vld [vmem:[#allocation2 + $0xba8] sm:$0xff]
    %v509 = vld [vmem:[#allocation2 + $0xbb0] sm:$0xff]
    %v510 = vld [vmem:[#allocation2 + $0xbb8] sm:$0xff]
    %v511 = vld [vmem:[#allocation2 + $0xbc0] sm:$0xff]
    %v512 = vld [vmem:[#allocation2 + $0xbc8] sm:$0xff]
    %v513 = vld [vmem:[#allocation2 + $0xbd0] sm:$0xff]
    %v514 = vld [vmem:[#allocation2 + $0xbd8] sm:$0xff]
    %v515 = vld [vmem:[#allocation2 + $0xbe0] sm:$0xff]
    %v516 = vld [vmem:[#allocation2 + $0xbe8] sm:$0xff]
    %v517 = vld [vmem:[#allocation2 + $0xbf0] sm:$0xff]
    %v518 = vld [vmem:[#allocation2 + $0xbf8] sm:$0xff]
    %v519 = vld [vmem:[#allocation2 + $0xc00] sm:$0xff]
    %v520 = vld [vmem:[#allocation2 + $0xc08] sm:$0xff]
    %v521 = vld [vmem:[#allocation2 + $0xc10] sm:$0xff]
    %v522 = vld [vmem:[#allocation2 + $0xc18] sm:$0xff]
    %v523 = vld [vmem:[#allocation2 + $0xc20] sm:$0xff]
    %v524 = vld [vmem:[#allocation2 + $0xc28] sm:$0xff]
    %v525 = vld [vmem:[#allocation2 + $0xc30] sm:$0xff]
    %v526 = vld [vmem:[#allocation2 + $0xc38] sm:$0xff]
    %v527 = vld [vmem:[#allocation2 + $0xc40] sm:$0xff]
    %v528 = vld [vmem:[#allocation2 + $0xc48] sm:$0xff]
    %v529 = vld [vmem:[#allocation2 + $0xc50] sm:$0xff]
    %v530 = vld [vmem:[#allocation2 + $0xc58] sm:$0xff]
    %v531 = vld [vmem:[#allocation2 + $0xc60] sm:$0xff]
    %v532 = vld [vmem:[#allocation2 + $0xc68] sm:$0xff]
    %v533 = vld [vmem:[#allocation2 + $0xc70] sm:$0xff]
    %v534 = vld [vmem:[#allocation2 + $0xc78] sm:$0xff]
    %v535 = vld [vmem:[#allocation2 + $0xc80] sm:$0xff]
    %v536 = vld [vmem:[#allocation2 + $0xc88] sm:$0xff]
    %v537 = vld [vmem:[#allocation2 + $0xc90] sm:$0xff]
    %v538 = vld [vmem:[#allocation2 + $0xc98] sm:$0xff]
    %v539 = vld [vmem:[#allocation2 + $0xca0] sm:$0xff]
    %v540 = vld [vmem:[#allocation2 + $0xca8] sm:$0xff]
    %v541 = vld [vmem:[#allocation2 + $0xcb0] sm:$0xff]
    %v542 = vld [vmem:[#allocation2 + $0xcb8] sm:$0xff]
    %v543 = vld [vmem:[#allocation2 + $0xcc0] sm:$0xff]
    %v544 = vld [vmem:[#allocation2 + $0xcc8] sm:$0xff]
    %v545 = vld [vmem:[#allocation2 + $0xcd0] sm:$0xff]
    %v546 = vld [vmem:[#allocation2 + $0xcd8] sm:$0xff]
    %v547 = vld [vmem:[#allocation2 + $0xce0] sm:$0xff]
    %v548 = vld [vmem:[#allocation2 + $0xce8] sm:$0xff]
    %v549 = vld [vmem:[#allocation2 + $0xcf0] sm:$0xff]
    %v550 = vld [vmem:[#allocation2 + $0xcf8] sm:$0xff]
    %v551 = vld [vmem:[#allocation2 + $0xd00] sm:$0xff]
    %v552 = vld [vmem:[#allocation2 + $0xd08] sm:$0xff]
    %v553 = vld [vmem:[#allocation2 + $0xd10] sm:$0xff]
    %v554 = vld [vmem:[#allocation2 + $0xd18] sm:$0xff]
    %v555 = vld [vmem:[#allocation2 + $0xd20] sm:$0xff]
    %v556 = vld [vmem:[#allocation2 + $0xd28] sm:$0xff]
    %v557 = vld [vmem:[#allocation2 + $0xd30] sm:$0xff]
    %v558 = vld [vmem:[#allocation2 + $0xd38] sm:$0xff]
    %v559 = vld [vmem:[#allocation2 + $0xd40] sm:$0xff]
    %v560 = vld [vmem:[#allocation2 + $0xd48] sm:$0xff]
    %v561 = vld [vmem:[#allocation2 + $0xd50] sm:$0xff]
    %v562 = vld [vmem:[#allocation2 + $0xd58] sm:$0xff]
    %v563 = vld [vmem:[#allocation2 + $0xd60] sm:$0xff]
    %v564 = vld [vmem:[#allocation2 + $0xd68] sm:$0xff]
    %v565 = vld [vmem:[#allocation2 + $0xd70] sm:$0xff]
    %v566 = vld [vmem:[#allocation2 + $0xd78] sm:$0xff]
    %v567 = vld [vmem:[#allocation2 + $0xd80] sm:$0xff]
    %v568 = vld [vmem:[#allocation2 + $0xd88] sm:$0xff]
    %v569 = vld [vmem:[#allocation2 + $0xd90] sm:$0xff]
    %v570 = vld [vmem:[#allocation2 + $0xd98] sm:$0xff]
    %v571 = vld [vmem:[#allocation2 + $0xda0] sm:$0xff]
    %v572 = vld [vmem:[#allocation2 + $0xda8] sm:$0xff]
    %v573 = vld [vmem:[#allocation2 + $0xdb0] sm:$0xff]
    %v574 = vld [vmem:[#allocation2 + $0xdb8] sm:$0xff]
    %v575 = vld [vmem:[#allocation2 + $0xdc0] sm:$0xff]
    %v576 = vld [vmem:[#allocation2 + $0xdc8] sm:$0xff]
    %v577 = vld [vmem:[#allocation2 + $0xdd0] sm:$0xff]
    %v578 = vld [vmem:[#allocation2 + $0xdd8] sm:$0xff]
    %v579 = vld [vmem:[#allocation2 + $0xde0] sm:$0xff]
    %v580 = vld [vmem:[#allocation2 + $0xde8] sm:$0xff]
    %v581 = vld [vmem:[#allocation2 + $0xdf0] sm:$0xff]
    %v582 = vld [vmem:[#allocation2 + $0xdf8] sm:$0xff]
    %v583 = vld [vmem:[#allocation2 + $0xe00] sm:$0xff]
    %v584 = vld [vmem:[#allocation2 + $0xe08] sm:$0xff]
    %v585 = vld [vmem:[#allocation2 + $0xe10] sm:$0xff]
    %v586 = vld [vmem:[#allocation2 + $0xe18] sm:$0xff]
    %v587 = vld [vmem:[#allocation2 + $0xe20] sm:$0xff]
    %v588 = vld [vmem:[#allocation2 + $0xe28] sm:$0xff]
    %v589 = vld [vmem:[#allocation2 + $0xe30] sm:$0xff]
    %v590 = vld [vmem:[#allocation2 + $0xe38] sm:$0xff]
    %v591 = vld [vmem:[#allocation2 + $0xe40] sm:$0xff]
    %v592 = vld [vmem:[#allocation2 + $0xe48] sm:$0xff]
    %v593 = vld [vmem:[#allocation2 + $0xe50] sm:$0xff]
    %v594 = vld [vmem:[#allocation2 + $0xe58] sm:$0xff]
    %v595 = vld [vmem:[#allocation2 + $0xe60] sm:$0xff]
    %v596 = vld [vmem:[#allocation2 + $0xe68] sm:$0xff]
    %v597 = vld [vmem:[#allocation2 + $0xe70] sm:$0xff]
    %v598 = vld [vmem:[#allocation2 + $0xe78] sm:$0xff]
    %v599 = vld [vmem:[#allocation2 + $0xe80] sm:$0xff]
    %v600 = vld [vmem:[#allocation2 + $0xe88] sm:$0xff]
    %v601 = vld [vmem:[#allocation2 + $0xe90] sm:$0xff]
    %v602 = vld [vmem:[#allocation2 + $0xe98] sm:$0xff]
    %v603 = vld [vmem:[#allocation2 + $0xea0] sm:$0xff]
    %v604 = vld [vmem:[#allocation2 + $0xea8] sm:$0xff]
    %v605 = vld [vmem:[#allocation2 + $0xeb0] sm:$0xff]
    %v606 = vld [vmem:[#allocation2 + $0xeb8] sm:$0xff]
    %v607 = vld [vmem:[#allocation2 + $0xec0] sm:$0xff]
    %v608 = vld [vmem:[#allocation2 + $0xec8] sm:$0xff]
    %v609 = vld [vmem:[#allocation2 + $0xed0] sm:$0xff]
    %v610 = vld [vmem:[#allocation2 + $0xed8] sm:$0xff]
    %v611 = vld [vmem:[#allocation2 + $0xee0] sm:$0xff]
    %v612 = vld [vmem:[#allocation2 + $0xee8] sm:$0xff]
    %v613 = vld [vmem:[#allocation2 + $0xef0] sm:$0xff]
    %v614 = vld [vmem:[#allocation2 + $0xef8] sm:$0xff]
    %v615 = vld [vmem:[#allocation2 + $0xf00] sm:$0xff]
    %v616 = vld [vmem:[#allocation2 + $0xf08] sm:$0xff]
    %v617 = vld [vmem:[#allocation2 + $0xf10] sm:$0xff]
    %v618 = vld [vmem:[#allocation2 + $0xf18] sm:$0xff]
    %v619 = vld [vmem:[#allocation2 + $0xf20] sm:$0xff]
    %v620 = vld [vmem:[#allocation2 + $0xf28] sm:$0xff]
    %v621 = vld [vmem:[#allocation2 + $0xf30] sm:$0xff]
    %v622 = vld [vmem:[#allocation2 + $0xf38] sm:$0xff]
    %v623 = vld [vmem:[#allocation2 + $0xf40] sm:$0xff]
    %v624 = vld [vmem:[#allocation2 + $0xf48] sm:$0xff]
    %v625 = vld [vmem:[#allocation2 + $0xf50] sm:$0xff]
    %v626 = vld [vmem:[#allocation2 + $0xf58] sm:$0xff]
    %v627 = vld [vmem:[#allocation2 + $0xf60] sm:$0xff]
    %v628 = vld [vmem:[#allocation2 + $0xf68] sm:$0xff]
    %v629 = vld [vmem:[#allocation2 + $0xf70] sm:$0xff]
    %v630 = vld [vmem:[#allocation2 + $0xf78] sm:$0xff]
    %v631 = vld [vmem:[#allocation2 + $0xf80] sm:$0xff]
    %v632 = vld [vmem:[#allocation2 + $0xf88] sm:$0xff]
    %v633 = vld [vmem:[#allocation2 + $0xf90] sm:$0xff]
    %v634 = vld [vmem:[#allocation2 + $0xf98] sm:$0xff]
    %v635 = vld [vmem:[#allocation2 + $0xfa0] sm:$0xff]
    %v636 = vld [vmem:[#allocation2 + $0xfa8] sm:$0xff]
    %v637 = vld [vmem:[#allocation2 + $0xfb0] sm:$0xff]
    %v638 = vld [vmem:[#allocation2 + $0xfb8] sm:$0xff]
    %v639 = vld [vmem:[#allocation2 + $0xfc0] sm:$0xff]
    %v640 = vld [vmem:[#allocation2 + $0xfc8] sm:$0xff]
    %v641 = vld [vmem:[#allocation2 + $0xfd0] sm:$0xff]
    %v642 = vld [vmem:[#allocation2 + $0xfd8] sm:$0xff]
    %v643 = vld [vmem:[#allocation2 + $0xfe0] sm:$0xff]
    %v644 = vld [vmem:[#allocation2 + $0xfe8] sm:$0xff]
    %v645 = vld [vmem:[#allocation2 + $0xff0] sm:$0xff]
    %v646 = vld [vmem:[#allocation2 + $0xff8] sm:$0xff]
    %v647 = vld [vmem:[#allocation4] sm:$0xf]
    %v649 = vlaneseq
    %v650 = vshrl.u32 %v649, 7
    %v651 = vsub.s32 0, %v650
    %v652 = vrot.slane %v647, %v651
    %v653 = vlaneseq
    %v654 = vshrl.u32 %v653, 7
    %v655 = vsub.s32 1, %v654
    %v656 = vrot.slane %v647, %v655
    %v657 = vlaneseq
    %v658 = vshrl.u32 %v657, 7
    %v659 = vsub.s32 2, %v658
    %v660 = vrot.slane %v647, %v659
    %v661 = vlaneseq
    %v662 = vshrl.u32 %v661, 7
    %v663 = vsub.s32 3, %v662
    %v664 = vrot.slane %v647, %v663
    %v671 = vcombine.high %v133, %v133
    %v673 = vunpack.c.l.s4 1983009808
    %v674 = vunpack.c.0.s8 %v673
    %v675 = vlaneseq
    %v676 = vshrl.u32 %v675, 7
    %v677 = vsub.s32 %v674, %v676
    %v678 = vrot.slane %v133, %v677
    %v680 = vunpack.c.l.s4 1983009808
    %v681 = vunpack.c.0.s8 %v680
    %v682 = vlaneseq
    %v683 = vshrl.u32 %v682, 7
    %v684 = vsub.s32 %v681, %v683
    %v685 = vrot.slane %v671, %v684
    %v686 = vcombine.high %v678, %v678
    %v687 = vcombine.high %v685, %v685
    %v688 = vcombine.high %v134, %v134
    %v690 = vunpack.c.l.s4 1983009808
    %v691 = vunpack.c.0.s8 %v690
    %v692 = vlaneseq
    %v693 = vshrl.u32 %v692, 7
    %v694 = vsub.s32 %v691, %v693
    %v695 = vrot.slane %v134, %v694
    %v697 = vunpack.c.l.s4 1983009808
    %v698 = vunpack.c.0.s8 %v697
    %v699 = vlaneseq
    %v700 = vshrl.u32 %v699, 7
    %v701 = vsub.s32 %v698, %v700
    %v702 = vrot.slane %v688, %v701
    %v703 = vcombine.high %v695, %v695
    %v704 = vcombine.high %v702, %v702
    %713 = vmatprep.subr.mxu0 %v136
    %714 = vmatpush1.msra.mxu0 %v135
    %715 = vmatprep.subr.mxu0 %v140
    %716 = vmatpush1.msra.mxu0 %v139
    %717 = vmatprep.subr.mxu0 %v144
    %718 = vmatpush1.msra.mxu0 %v143
    %719 = vmatprep.subr.mxu0 %v148
    %720 = vmatpush1.msra.mxu0 %v147
    %721 = vmatprep.subr.mxu0 %v152
    %722 = vmatpush1.msra.mxu0 %v151
    %723 = vmatprep.subr.mxu0 %v156
    %724 = vmatpush1.msra.mxu0 %v155
    %725 = vmatprep.subr.mxu0 %v160
    %726 = vmatpush1.msra.mxu0 %v159
    %727 = vmatprep.subr.mxu0 %v164
    %728 = vmatpush1.msra.mxu0 %v163
    %729 = vmatprep.subr.mxu0 %v168
    %730 = vmatpush1.msra.mxu0 %v167
    %731 = vmatprep.subr.mxu0 %v172
    %732 = vmatpush1.msra.mxu0 %v171
    %733 = vmatprep.subr.mxu0 %v176
    %734 = vmatpush1.msra.mxu0 %v175
    %735 = vmatprep.subr.mxu0 %v180
    %736 = vmatpush1.msra.mxu0 %v179
    %737 = vmatprep.subr.mxu0 %v184
    %738 = vmatpush1.msra.mxu0 %v183
    %739 = vmatprep.subr.mxu0 %v188
    %740 = vmatpush1.msra.mxu0 %v187
    %741 = vmatprep.subr.mxu0 %v192
    %742 = vmatpush1.msra.mxu0 %v191
    %743 = vmatprep.subr.mxu0 %v196
    %744 = vmatpush1.msra.mxu0 %v195
    %745 = vmatprep.subr.mxu0 %v200
    %746 = vmatpush1.msra.mxu0 %v199
    %747 = vmatprep.subr.mxu0 %v204
    %748 = vmatpush1.msra.mxu0 %v203
    %749 = vmatprep.subr.mxu0 %v208
    %750 = vmatpush1.msra.mxu0 %v207
    %751 = vmatprep.subr.mxu0 %v212
    %752 = vmatpush1.msra.mxu0 %v211
    %753 = vmatprep.subr.mxu0 %v216
    %754 = vmatpush1.msra.mxu0 %v215
    %755 = vmatprep.subr.mxu0 %v220
    %756 = vmatpush1.msra.mxu0 %v219
    %757 = vmatprep.subr.mxu0 %v224
    %758 = vmatpush1.msra.mxu0 %v223
    %759 = vmatprep.subr.mxu0 %v228
    %760 = vmatpush1.msra.mxu0 %v227
    %761 = vmatprep.subr.mxu0 %v232
    %762 = vmatpush1.msra.mxu0 %v231
    %763 = vmatprep.subr.mxu0 %v236
    %764 = vmatpush1.msra.mxu0 %v235
    %765 = vmatprep.subr.mxu0 %v240
    %766 = vmatpush1.msra.mxu0 %v239
    %767 = vmatprep.subr.mxu0 %v244
    %768 = vmatpush1.msra.mxu0 %v243
    %769 = vmatprep.subr.mxu0 %v248
    %770 = vmatpush1.msra.mxu0 %v247
    %771 = vmatprep.subr.mxu0 %v252
    %772 = vmatpush1.msra.mxu0 %v251
    %773 = vmatprep.subr.mxu0 %v256
    %774 = vmatpush1.msra.mxu0 %v255
    %775 = vmatprep.subr.mxu0 %v260
    %776 = vmatpush1.msra.mxu0 %v259
    %777 = vmatprep.mubr.f32.mxu0 %v686
    %778 = vmatmul.mubr.f32.gmra.mrb[0].mxu0 %v678
    %v779 = vpop.f32.mrb[0].mxu0
    %v780 = vadd.f32 %v652, %v779
    %v781 = vpop.f32.mrb[0].mxu0
    %v782 = vadd.f32 %v656, %v781
    %783 = vdwg.mxu0
    %784 = vmatprep.subr.mxu0 %v264
    %785 = vmatpush1.msra.mxu0 %v263
    %786 = vmatprep.subr.mxu0 %v268
    %787 = vmatpush1.msra.mxu0 %v267
    %788 = vmatprep.subr.mxu0 %v272
    %789 = vmatpush1.msra.mxu0 %v271
    %790 = vmatprep.subr.mxu0 %v276
    %791 = vmatpush1.msra.mxu0 %v275
    %792 = vmatprep.subr.mxu0 %v280
    %793 = vmatpush1.msra.mxu0 %v279
    %794 = vmatprep.subr.mxu0 %v284
    %795 = vmatpush1.msra.mxu0 %v283
    %796 = vmatprep.subr.mxu0 %v288
    %797 = vmatpush1.msra.mxu0 %v287
    %798 = vmatprep.subr.mxu0 %v292
    %799 = vmatpush1.msra.mxu0 %v291
    %800 = vmatprep.subr.mxu0 %v296
    %801 = vmatpush1.msra.mxu0 %v295
    %802 = vmatprep.subr.mxu0 %v300
    %803 = vmatpush1.msra.mxu0 %v299
    %804 = vmatprep.subr.mxu0 %v304
    %805 = vmatpush1.msra.mxu0 %v303
    %806 = vmatprep.subr.mxu0 %v308
    %807 = vmatpush1.msra.mxu0 %v307
    %808 = vmatprep.subr.mxu0 %v312
    %809 = vmatpush1.msra.mxu0 %v311
    %810 = vmatprep.subr.mxu0 %v316
    %811 = vmatpush1.msra.mxu0 %v315
    %812 = vmatprep.subr.mxu0 %v320
    %813 = vmatpush1.msra.mxu0 %v319
    %814 = vmatprep.subr.mxu0 %v324
    %815 = vmatpush1.msra.mxu0 %v323
    %816 = vmatprep.subr.mxu0 %v328
    %817 = vmatpush1.msra.mxu0 %v327
    %818 = vmatprep.subr.mxu0 %v332
    %819 = vmatpush1.msra.mxu0 %v331
    %820 = vmatprep.subr.mxu0 %v336
    %821 = vmatpush1.msra.mxu0 %v335
    %822 = vmatprep.subr.mxu0 %v340
    %823 = vmatpush1.msra.mxu0 %v339
    %824 = vmatprep.subr.mxu0 %v344
    %825 = vmatpush1.msra.mxu0 %v343
    %826 = vmatprep.subr.mxu0 %v348
    %827 = vmatpush1.msra.mxu0 %v347
    %828 = vmatprep.subr.mxu0 %v352
    %829 = vmatpush1.msra.mxu0 %v351
    %830 = vmatprep.subr.mxu0 %v356
    %831 = vmatpush1.msra.mxu0 %v355
    %832 = vmatprep.subr.mxu0 %v360
    %833 = vmatpush1.msra.mxu0 %v359
    %834 = vmatprep.subr.mxu0 %v364
    %835 = vmatpush1.msra.mxu0 %v363
    %836 = vmatprep.subr.mxu0 %v368
    %837 = vmatpush1.msra.mxu0 %v367
    %838 = vmatprep.subr.mxu0 %v372
    %839 = vmatpush1.msra.mxu0 %v371
    %840 = vmatprep.subr.mxu0 %v376
    %841 = vmatpush1.msra.mxu0 %v375
    %842 = vmatprep.subr.mxu0 %v380
    %843 = vmatpush1.msra.mxu0 %v379
    %844 = vmatprep.subr.mxu0 %v384
    %845 = vmatpush1.msra.mxu0 %v383
    %846 = vmatprep.subr.mxu0 %v388
    %847 = vmatpush1.msra.mxu0 %v387
    %848 = vmatprep.mubr.f32.mxu0 %v687
    %849 = vmatmul.mubr.f32.gmra.mrb[0].mxu0 %v685
    %v850 = vpop.f32.mrb[0].mxu0
    %v851 = vadd.f32 %v780, %v850
    %v852 = vpop.f32.mrb[0].mxu0
    %v853 = vadd.f32 %v782, %v852
    %854 = vdwg.mxu0
    %855 = vmatprep.subr.mxu0 %v392
    %856 = vmatpush1.msra.mxu0 %v391
    %857 = vmatprep.subr.mxu0 %v396
    %858 = vmatpush1.msra.mxu0 %v395
    %859 = vmatprep.subr.mxu0 %v400
    %860 = vmatpush1.msra.mxu0 %v399
    %861 = vmatprep.subr.mxu0 %v404
    %862 = vmatpush1.msra.mxu0 %v403
    %863 = vmatprep.subr.mxu0 %v408
    %864 = vmatpush1.msra.mxu0 %v407
    %865 = vmatprep.subr.mxu0 %v412
    %866 = vmatpush1.msra.mxu0 %v411
    %867 = vmatprep.subr.mxu0 %v416
    %868 = vmatpush1.msra.mxu0 %v415
    %869 = vmatprep.subr.mxu0 %v420
    %870 = vmatpush1.msra.mxu0 %v419
    %871 = vmatprep.subr.mxu0 %v424
    %872 = vmatpush1.msra.mxu0 %v423
    %873 = vmatprep.subr.mxu0 %v428
    %874 = vmatpush1.msra.mxu0 %v427
    %875 = vmatprep.subr.mxu0 %v432
    %876 = vmatpush1.msra.mxu0 %v431
    %877 = vmatprep.subr.mxu0 %v436
    %878 = vmatpush1.msra.mxu0 %v435
    %879 = vmatprep.subr.mxu0 %v440
    %880 = vmatpush1.msra.mxu0 %v439
    %881 = vmatprep.subr.mxu0 %v444
    %882 = vmatpush1.msra.mxu0 %v443
    %883 = vmatprep.subr.mxu0 %v448
    %884 = vmatpush1.msra.mxu0 %v447
    %885 = vmatprep.subr.mxu0 %v452
    %886 = vmatpush1.msra.mxu0 %v451
    %887 = vmatprep.subr.mxu0 %v456
    %888 = vmatpush1.msra.mxu0 %v455
    %889 = vmatprep.subr.mxu0 %v460
    %890 = vmatpush1.msra.mxu0 %v459
    %891 = vmatprep.subr.mxu0 %v464
    %892 = vmatpush1.msra.mxu0 %v463
    %893 = vmatprep.subr.mxu0 %v468
    %894 = vmatpush1.msra.mxu0 %v467
    %895 = vmatprep.subr.mxu0 %v472
    %896 = vmatpush1.msra.mxu0 %v471
    %897 = vmatprep.subr.mxu0 %v476
    %898 = vmatpush1.msra.mxu0 %v475
    %899 = vmatprep.subr.mxu0 %v480
    %900 = vmatpush1.msra.mxu0 %v479
    %901 = vmatprep.subr.mxu0 %v484
    %902 = vmatpush1.msra.mxu0 %v483
    %903 = vmatprep.subr.mxu0 %v488
    %904 = vmatpush1.msra.mxu0 %v487
    %905 = vmatprep.subr.mxu0 %v492
    %906 = vmatpush1.msra.mxu0 %v491
    %907 = vmatprep.subr.mxu0 %v496
    %908 = vmatpush1.msra.mxu0 %v495
    %909 = vmatprep.subr.mxu0 %v500
    %910 = vmatpush1.msra.mxu0 %v499
    %911 = vmatprep.subr.mxu0 %v504
    %912 = vmatpush1.msra.mxu0 %v503
    %913 = vmatprep.subr.mxu0 %v508
    %914 = vmatpush1.msra.mxu0 %v507
    %915 = vmatprep.subr.mxu0 %v512
    %916 = vmatpush1.msra.mxu0 %v511
    %917 = vmatprep.subr.mxu0 %v516
    %918 = vmatpush1.msra.mxu0 %v515
    %919 = vmatprep.mubr.f32.mxu0 %v703
    %920 = vmatmul.mubr.f32.gmra.mrb[0].mxu0 %v695
    %v921 = vpop.f32.mrb[0].mxu0
    %v922 = vadd.f32 %v851, %v921
    %v923 = vpop.f32.mrb[0].mxu0
    %v924 = vadd.f32 %v853, %v923
    %925 = vdwg.mxu0
    %926 = vmatprep.subr.mxu0 %v520
    %927 = vmatpush1.msra.mxu0 %v519
    %928 = vmatprep.subr.mxu0 %v524
    %929 = vmatpush1.msra.mxu0 %v523
    %930 = vmatprep.subr.mxu0 %v528
    %931 = vmatpush1.msra.mxu0 %v527
    %932 = vmatprep.subr.mxu0 %v532
    %933 = vmatpush1.msra.mxu0 %v531
    %934 = vmatprep.subr.mxu0 %v536
    %935 = vmatpush1.msra.mxu0 %v535
    %936 = vmatprep.subr.mxu0 %v540
    %937 = vmatpush1.msra.mxu0 %v539
    %938 = vmatprep.subr.mxu0 %v544
    %939 = vmatpush1.msra.mxu0 %v543
    %940 = vmatprep.subr.mxu0 %v548
    %941 = vmatpush1.msra.mxu0 %v547
    %942 = vmatprep.subr.mxu0 %v552
    %943 = vmatpush1.msra.mxu0 %v551
    %944 = vmatprep.subr.mxu0 %v556
    %945 = vmatpush1.msra.mxu0 %v555
    %946 = vmatprep.subr.mxu0 %v560
    %947 = vmatpush1.msra.mxu0 %v559
    %948 = vmatprep.subr.mxu0 %v564
    %949 = vmatpush1.msra.mxu0 %v563
    %950 = vmatprep.subr.mxu0 %v568
    %951 = vmatpush1.msra.mxu0 %v567
    %952 = vmatprep.subr.mxu0 %v572
    %953 = vmatpush1.msra.mxu0 %v571
    %954 = vmatprep.subr.mxu0 %v576
    %955 = vmatpush1.msra.mxu0 %v575
    %956 = vmatprep.subr.mxu0 %v580
    %957 = vmatpush1.msra.mxu0 %v579
    %958 = vmatprep.subr.mxu0 %v584
    %959 = vmatpush1.msra.mxu0 %v583
    %960 = vmatprep.subr.mxu0 %v588
    %961 = vmatpush1.msra.mxu0 %v587
    %962 = vmatprep.subr.mxu0 %v592
    %963 = vmatpush1.msra.mxu0 %v591
    %964 = vmatprep.subr.mxu0 %v596
    %965 = vmatpush1.msra.mxu0 %v595
    %966 = vmatprep.subr.mxu0 %v600
    %967 = vmatpush1.msra.mxu0 %v599
    %968 = vmatprep.subr.mxu0 %v604
    %969 = vmatpush1.msra.mxu0 %v603
    %970 = vmatprep.subr.mxu0 %v608
    %971 = vmatpush1.msra.mxu0 %v607
    %972 = vmatprep.subr.mxu0 %v612
    %973 = vmatpush1.msra.mxu0 %v611
    %974 = vmatprep.subr.mxu0 %v616
    %975 = vmatpush1.msra.mxu0 %v615
    %976 = vmatprep.subr.mxu0 %v620
    %977 = vmatpush1.msra.mxu0 %v619
    %978 = vmatprep.subr.mxu0 %v624
    %979 = vmatpush1.msra.mxu0 %v623
    %980 = vmatprep.subr.mxu0 %v628
    %981 = vmatpush1.msra.mxu0 %v627
    %982 = vmatprep.subr.mxu0 %v632
    %983 = vmatpush1.msra.mxu0 %v631
    %984 = vmatprep.subr.mxu0 %v636
    %985 = vmatpush1.msra.mxu0 %v635
    %986 = vmatprep.subr.mxu0 %v640
    %987 = vmatpush1.msra.mxu0 %v639
    %988 = vmatprep.subr.mxu0 %v644
    %989 = vmatpush1.msra.mxu0 %v643
    %990 = vmatprep.mubr.f32.mxu0 %v704
    %991 = vmatmul.mubr.f32.gmra.mrb[0].mxu0 %v702
    %v992 = vpop.f32.mrb[0].mxu0
    %v993 = vadd.f32 %v922, %v992
    %v994 = vpop.f32.mrb[0].mxu0
    %v995 = vadd.f32 %v924, %v994
    %996 = vdwg.mxu0
    %997 = vmatprep.subr.mxu0 %v138
    %998 = vmatpush1.msra.mxu0 %v137
    %999 = vmatprep.subr.mxu0 %v142
    %1000 = vmatpush1.msra.mxu0 %v141
    %1001 = vmatprep.subr.mxu0 %v146
    %1002 = vmatpush1.msra.mxu0 %v145
    %1003 = vmatprep.subr.mxu0 %v150
    %1004 = vmatpush1.msra.mxu0 %v149
    %1005 = vmatprep.subr.mxu0 %v154
    %1006 = vmatpush1.msra.mxu0 %v153
    %1007 = vmatprep.subr.mxu0 %v158
    %1008 = vmatpush1.msra.mxu0 %v157
    %1009 = vmatprep.subr.mxu0 %v162
    %1010 = vmatpush1.msra.mxu0 %v161
    %1011 = vmatprep.subr.mxu0 %v166
    %1012 = vmatpush1.msra.mxu0 %v165
    %1013 = vmatprep.subr.mxu0 %v170
    %1014 = vmatpush1.msra.mxu0 %v169
    %1015 = vmatprep.subr.mxu0 %v174
    %1016 = vmatpush1.msra.mxu0 %v173
    %1017 = vmatprep.subr.mxu0 %v178
    %1018 = vmatpush1.msra.mxu0 %v177
    %1019 = vmatprep.subr.mxu0 %v182
    %1020 = vmatpush1.msra.mxu0 %v181
    %1021 = vmatprep.subr.mxu0 %v186
    %1022 = vmatpush1.msra.mxu0 %v185
    %1023 = vmatprep.subr.mxu0 %v190
    %1024 = vmatpush1.msra.mxu0 %v189
    %1025 = vmatprep.subr.mxu0 %v194
    %1026 = vmatpush1.msra.mxu0 %v193
    %1027 = vmatprep.subr.mxu0 %v198
    %1028 = vmatpush1.msra.mxu0 %v197
    %1029 = vmatprep.subr.mxu0 %v202
    %1030 = vmatpush1.msra.mxu0 %v201
    %1031 = vmatprep.subr.mxu0 %v206
    %1032 = vmatpush1.msra.mxu0 %v205
    %1033 = vmatprep.subr.mxu0 %v210
    %1034 = vmatpush1.msra.mxu0 %v209
    %1035 = vmatprep.subr.mxu0 %v214
    %1036 = vmatpush1.msra.mxu0 %v213
    %1037 = vmatprep.subr.mxu0 %v218
    %1038 = vmatpush1.msra.mxu0 %v217
    %1039 = vmatprep.subr.mxu0 %v222
    %1040 = vmatpush1.msra.mxu0 %v221
    %1041 = vmatprep.subr.mxu0 %v226
    %1042 = vmatpush1.msra.mxu0 %v225
    %1043 = vmatprep.subr.mxu0 %v230
    %1044 = vmatpush1.msra.mxu0 %v229
    %1045 = vmatprep.subr.mxu0 %v234
    %1046 = vmatpush1.msra.mxu0 %v233
    %1047 = vmatprep.subr.mxu0 %v238
    %1048 = vmatpush1.msra.mxu0 %v237
    %1049 = vmatprep.subr.mxu0 %v242
    %1050 = vmatpush1.msra.mxu0 %v241
    %1051 = vmatprep.subr.mxu0 %v246
    %1052 = vmatpush1.msra.mxu0 %v245
    %1053 = vmatprep.subr.mxu0 %v250
    %1054 = vmatpush1.msra.mxu0 %v249
    %1055 = vmatprep.subr.mxu0 %v254
    %1056 = vmatpush1.msra.mxu0 %v253
    %1057 = vmatprep.subr.mxu0 %v258
    %1058 = vmatpush1.msra.mxu0 %v257
    %1059 = vmatprep.subr.mxu0 %v262
    %1060 = vmatpush1.msra.mxu0 %v261
    %1061 = vmatprep.mubr.f32.mxu0 %v686
    %1062 = vmatmul.mubr.f32.gmra.mrb[0].mxu0 %v678
    %v1063 = vpop.f32.mrb[0].mxu0
    %v1064 = vadd.f32 %v660, %v1063
    %v1065 = vpop.f32.mrb[0].mxu0
    %v1066 = vadd.f32 %v664, %v1065
    %1067 = vdwg.mxu0
    %1068 = vmatprep.subr.mxu0 %v266
    %1069 = vmatpush1.msra.mxu0 %v265
    %1070 = vmatprep.subr.mxu0 %v270
    %1071 = vmatpush1.msra.mxu0 %v269
    %1072 = vmatprep.subr.mxu0 %v274
    %1073 = vmatpush1.msra.mxu0 %v273
    %1074 = vmatprep.subr.mxu0 %v278
    %1075 = vmatpush1.msra.mxu0 %v277
    %1076 = vmatprep.subr.mxu0 %v282
    %1077 = vmatpush1.msra.mxu0 %v281
    %1078 = vmatprep.subr.mxu0 %v286
    %1079 = vmatpush1.msra.mxu0 %v285
    %1080 = vmatprep.subr.mxu0 %v290
    %1081 = vmatpush1.msra.mxu0 %v289
    %1082 = vmatprep.subr.mxu0 %v294
    %1083 = vmatpush1.msra.mxu0 %v293
    %1084 = vmatprep.subr.mxu0 %v298
    %1085 = vmatpush1.msra.mxu0 %v297
    %1086 = vmatprep.subr.mxu0 %v302
    %1087 = vmatpush1.msra.mxu0 %v301
    %1088 = vmatprep.subr.mxu0 %v306
    %1089 = vmatpush1.msra.mxu0 %v305
    %1090 = vmatprep.subr.mxu0 %v310
    %1091 = vmatpush1.msra.mxu0 %v309
    %1092 = vmatprep.subr.mxu0 %v314
    %1093 = vmatpush1.msra.mxu0 %v313
    %1094 = vmatprep.subr.mxu0 %v318
    %1095 = vmatpush1.msra.mxu0 %v317
    %1096 = vmatprep.subr.mxu0 %v322
    %1097 = vmatpush1.msra.mxu0 %v321
    %1098 = vmatprep.subr.mxu0 %v326
    %1099 = vmatpush1.msra.mxu0 %v325
    %1100 = vmatprep.subr.mxu0 %v330
    %1101 = vmatpush1.msra.mxu0 %v329
    %1102 = vmatprep.subr.mxu0 %v334
    %1103 = vmatpush1.msra.mxu0 %v333
    %1104 = vmatprep.subr.mxu0 %v338
    %1105 = vmatpush1.msra.mxu0 %v337
    %1106 = vmatprep.subr.mxu0 %v342
    %1107 = vmatpush1.msra.mxu0 %v341
    %1108 = vmatprep.subr.mxu0 %v346
    %1109 = vmatpush1.msra.mxu0 %v345
    %1110 = vmatprep.subr.mxu0 %v350
    %1111 = vmatpush1.msra.mxu0 %v349
    %1112 = vmatprep.subr.mxu0 %v354
    %1113 = vmatpush1.msra.mxu0 %v353
    %1114 = vmatprep.subr.mxu0 %v358
    %1115 = vmatpush1.msra.mxu0 %v357
    %1116 = vmatprep.subr.mxu0 %v362
    %1117 = vmatpush1.msra.mxu0 %v361
    %1118 = vmatprep.subr.mxu0 %v366
    %1119 = vmatpush1.msra.mxu0 %v365
    %1120 = vmatprep.subr.mxu0 %v370
    %1121 = vmatpush1.msra.mxu0 %v369
    %1122 = vmatprep.subr.mxu0 %v374
    %1123 = vmatpush1.msra.mxu0 %v373
    %1124 = vmatprep.subr.mxu0 %v378
    %1125 = vmatpush1.msra.mxu0 %v377
    %1126 = vmatprep.subr.mxu0 %v382
    %1127 = vmatpush1.msra.mxu0 %v381
    %1128 = vmatprep.subr.mxu0 %v386
    %1129 = vmatpush1.msra.mxu0 %v385
    %1130 = vmatprep.subr.mxu0 %v390
    %1131 = vmatpush1.msra.mxu0 %v389
    %1132 = vmatprep.mubr.f32.mxu0 %v687
    %1133 = vmatmul.mubr.f32.gmra.mrb[0].mxu0 %v685
    %v1134 = vpop.f32.mrb[0].mxu0
    %v1135 = vadd.f32 %v1064, %v1134
    %v1136 = vpop.f32.mrb[0].mxu0
    %v1137 = vadd.f32 %v1066, %v1136
    %1138 = vdwg.mxu0
    %1139 = vmatprep.subr.mxu0 %v394
    %1140 = vmatpush1.msra.mxu0 %v393
    %1141 = vmatprep.subr.mxu0 %v398
    %1142 = vmatpush1.msra.mxu0 %v397
    %1143 = vmatprep.subr.mxu0 %v402
    %1144 = vmatpush1.msra.mxu0 %v401
    %1145 = vmatprep.subr.mxu0 %v406
    %1146 = vmatpush1.msra.mxu0 %v405
    %1147 = vmatprep.subr.mxu0 %v410
    %1148 = vmatpush1.msra.mxu0 %v409
    %1149 = vmatprep.subr.mxu0 %v414
    %1150 = vmatpush1.msra.mxu0 %v413
    %1151 = vmatprep.subr.mxu0 %v418
    %1152 = vmatpush1.msra.mxu0 %v417
    %1153 = vmatprep.subr.mxu0 %v422
    %1154 = vmatpush1.msra.mxu0 %v421
    %1155 = vmatprep.subr.mxu0 %v426
    %1156 = vmatpush1.msra.mxu0 %v425
    %1157 = vmatprep.subr.mxu0 %v430
    %1158 = vmatpush1.msra.mxu0 %v429
    %1159 = vmatprep.subr.mxu0 %v434
    %1160 = vmatpush1.msra.mxu0 %v433
    %1161 = vmatprep.subr.mxu0 %v438
    %1162 = vmatpush1.msra.mxu0 %v437
    %1163 = vmatprep.subr.mxu0 %v442
    %1164 = vmatpush1.msra.mxu0 %v441
    %1165 = vmatprep.subr.mxu0 %v446
    %1166 = vmatpush1.msra.mxu0 %v445
    %1167 = vmatprep.subr.mxu0 %v450
    %1168 = vmatpush1.msra.mxu0 %v449
    %1169 = vmatprep.subr.mxu0 %v454
    %1170 = vmatpush1.msra.mxu0 %v453
    %1171 = vmatprep.subr.mxu0 %v458
    %1172 = vmatpush1.msra.mxu0 %v457
    %1173 = vmatprep.subr.mxu0 %v462
    %1174 = vmatpush1.msra.mxu0 %v461
    %1175 = vmatprep.subr.mxu0 %v466
    %1176 = vmatpush1.msra.mxu0 %v465
    %1177 = vmatprep.subr.mxu0 %v470
    %1178 = vmatpush1.msra.mxu0 %v469
    %1179 = vmatprep.subr.mxu0 %v474
    %1180 = vmatpush1.msra.mxu0 %v473
    %1181 = vmatprep.subr.mxu0 %v478
    %1182 = vmatpush1.msra.mxu0 %v477
    %1183 = vmatprep.subr.mxu0 %v482
    %1184 = vmatpush1.msra.mxu0 %v481
    %1185 = vmatprep.subr.mxu0 %v486
    %1186 = vmatpush1.msra.mxu0 %v485
    %1187 = vmatprep.subr.mxu0 %v490
    %1188 = vmatpush1.msra.mxu0 %v489
    %1189 = vmatprep.subr.mxu0 %v494
    %1190 = vmatpush1.msra.mxu0 %v493
    %1191 = vmatprep.subr.mxu0 %v498
    %1192 = vmatpush1.msra.mxu0 %v497
    %1193 = vmatprep.subr.mxu0 %v502
    %1194 = vmatpush1.msra.mxu0 %v501
    %1195 = vmatprep.subr.mxu0 %v506
    %1196 = vmatpush1.msra.mxu0 %v505
    %1197 = vmatprep.subr.mxu0 %v510
    %1198 = vmatpush1.msra.mxu0 %v509
    %1199 = vmatprep.subr.mxu0 %v514
    %1200 = vmatpush1.msra.mxu0 %v513
    %1201 = vmatprep.subr.mxu0 %v518
    %1202 = vmatpush1.msra.mxu0 %v517
    %1203 = vmatprep.mubr.f32.mxu0 %v703
    %1204 = vmatmul.mubr.f32.gmra.mrb[0].mxu0 %v695
    %v1205 = vpop.f32.mrb[0].mxu0
    %v1206 = vadd.f32 %v1135, %v1205
    %v1207 = vpop.f32.mrb[0].mxu0
    %v1208 = vadd.f32 %v1137, %v1207
    %1209 = vdwg.mxu0
    %1210 = vmatprep.subr.mxu0 %v522
    %1211 = vmatpush1.msra.mxu0 %v521
    %1212 = vmatprep.subr.mxu0 %v526
    %1213 = vmatpush1.msra.mxu0 %v525
    %1214 = vmatprep.subr.mxu0 %v530
    %1215 = vmatpush1.msra.mxu0 %v529
    %1216 = vmatprep.subr.mxu0 %v534
    %1217 = vmatpush1.msra.mxu0 %v533
    %1218 = vmatprep.subr.mxu0 %v538
    %1219 = vmatpush1.msra.mxu0 %v537
    %1220 = vmatprep.subr.mxu0 %v542
    %1221 = vmatpush1.msra.mxu0 %v541
    %1222 = vmatprep.subr.mxu0 %v546
    %1223 = vmatpush1.msra.mxu0 %v545
    %1224 = vmatprep.subr.mxu0 %v550
    %1225 = vmatpush1.msra.mxu0 %v549
    %1226 = vmatprep.subr.mxu0 %v554
    %1227 = vmatpush1.msra.mxu0 %v553
    %1228 = vmatprep.subr.mxu0 %v558
    %1229 = vmatpush1.msra.mxu0 %v557
    %1230 = vmatprep.subr.mxu0 %v562
    %1231 = vmatpush1.msra.mxu0 %v561
    %1232 = vmatprep.subr.mxu0 %v566
    %1233 = vmatpush1.msra.mxu0 %v565
    %1234 = vmatprep.subr.mxu0 %v570
    %1235 = vmatpush1.msra.mxu0 %v569
    %1236 = vmatprep.subr.mxu0 %v574
    %1237 = vmatpush1.msra.mxu0 %v573
    %1238 = vmatprep.subr.mxu0 %v578
    %1239 = vmatpush1.msra.mxu0 %v577
    %1240 = vmatprep.subr.mxu0 %v582
    %1241 = vmatpush1.msra.mxu0 %v581
    %1242 = vmatprep.subr.mxu0 %v586
    %1243 = vmatpush1.msra.mxu0 %v585
    %1244 = vmatprep.subr.mxu0 %v590
    %1245 = vmatpush1.msra.mxu0 %v589
    %1246 = vmatprep.subr.mxu0 %v594
    %1247 = vmatpush1.msra.mxu0 %v593
    %1248 = vmatprep.subr.mxu0 %v598
    %1249 = vmatpush1.msra.mxu0 %v597
    %1250 = vmatprep.subr.mxu0 %v602
    %1251 = vmatpush1.msra.mxu0 %v601
    %1252 = vmatprep.subr.mxu0 %v606
    %1253 = vmatpush1.msra.mxu0 %v605
    %1254 = vmatprep.subr.mxu0 %v610
    %1255 = vmatpush1.msra.mxu0 %v609
    %1256 = vmatprep.subr.mxu0 %v614
    %1257 = vmatpush1.msra.mxu0 %v613
    %1258 = vmatprep.subr.mxu0 %v618
    %1259 = vmatpush1.msra.mxu0 %v617
    %1260 = vmatprep.subr.mxu0 %v622
    %1261 = vmatpush1.msra.mxu0 %v621
    %1262 = vmatprep.subr.mxu0 %v626
    %1263 = vmatpush1.msra.mxu0 %v625
    %1264 = vmatprep.subr.mxu0 %v630
    %1265 = vmatpush1.msra.mxu0 %v629
    %1266 = vmatprep.subr.mxu0 %v634
    %1267 = vmatpush1.msra.mxu0 %v633
    %1268 = vmatprep.subr.mxu0 %v638
    %1269 = vmatpush1.msra.mxu0 %v637
    %1270 = vmatprep.subr.mxu0 %v642
    %1271 = vmatpush1.msra.mxu0 %v641
    %1272 = vmatprep.subr.mxu0 %v646
    %1273 = vmatpush1.msra.mxu0 %v645
    %1274 = vmatprep.mubr.f32.mxu0 %v704
    %1275 = vmatmul.mubr.f32.gmra.mrb[0].mxu0 %v702
    %v1276 = vpop.f32.mrb[0].mxu0
    %v1277 = vadd.f32 %v1206, %v1276
    %v1278 = vpop.f32.mrb[0].mxu0
    %v1279 = vadd.f32 %v1208, %v1278
    %1280 = vdwg.mxu0
    %v1281 = vmax.f32 %v993, 0.0
    %v1282 = vmax.f32 %v995, 0.0
    %v1283 = vmax.f32 %v1277, 0.0
    %v1284 = vmax.f32 %v1279, 0.0
    %v1285 = vld [vmem:[#allocation6] sm:$0xff]
    %v1286 = vld [vmem:[#allocation6 + $0x8] sm:$0xff]
    %v1287 = vld [vmem:[#allocation6 + $0x10] sm:$0xff]
    %v1288 = vld [vmem:[#allocation6 + $0x18] sm:$0xff]
    %v1289 = vld [vmem:[#allocation6 + $0x20] sm:$0xff]
    %v1290 = vld [vmem:[#allocation6 + $0x28] sm:$0xff]
    %v1291 = vld [vmem:[#allocation6 + $0x30] sm:$0xff]
    %v1292 = vld [vmem:[#allocation6 + $0x38] sm:$0xff]
    %v1293 = vld [vmem:[#allocation6 + $0x40] sm:$0xff]
    %v1294 = vld [vmem:[#allocation6 + $0x48] sm:$0xff]
    %v1295 = vld [vmem:[#allocation6 + $0x50] sm:$0xff]
    %v1296 = vld [vmem:[#allocation6 + $0x58] sm:$0xff]
    %v1297 = vld [vmem:[#allocation6 + $0x60] sm:$0xff]
    %v1298 = vld [vmem:[#allocation6 + $0x68] sm:$0xff]
    %v1299 = vld [vmem:[#allocation6 + $0x70] sm:$0xff]
    %v1300 = vld [vmem:[#allocation6 + $0x78] sm:$0xff]
    %v1301 = vld [vmem:[#allocation6 + $0x80] sm:$0xff]
    %v1302 = vld [vmem:[#allocation6 + $0x88] sm:$0xff]
    %v1303 = vld [vmem:[#allocation6 + $0x90] sm:$0xff]
    %v1304 = vld [vmem:[#allocation6 + $0x98] sm:$0xff]
    %v1305 = vld [vmem:[#allocation6 + $0xa0] sm:$0xff]
    %v1306 = vld [vmem:[#allocation6 + $0xa8] sm:$0xff]
    %v1307 = vld [vmem:[#allocation6 + $0xb0] sm:$0xff]
    %v1308 = vld [vmem:[#allocation6 + $0xb8] sm:$0xff]
    %v1309 = vld [vmem:[#allocation6 + $0xc0] sm:$0xff]
    %v1310 = vld [vmem:[#allocation6 + $0xc8] sm:$0xff]
    %v1311 = vld [vmem:[#allocation6 + $0xd0] sm:$0xff]
    %v1312 = vld [vmem:[#allocation6 + $0xd8] sm:$0xff]
    %v1313 = vld [vmem:[#allocation6 + $0xe0] sm:$0xff]
    %v1314 = vld [vmem:[#allocation6 + $0xe8] sm:$0xff]
    %v1315 = vld [vmem:[#allocation6 + $0xf0] sm:$0xff]
    %v1316 = vld [vmem:[#allocation6 + $0xf8] sm:$0xff]
    %v1317 = vld [vmem:[#allocation6 + $0x100] sm:$0xff]
    %v1318 = vld [vmem:[#allocation6 + $0x108] sm:$0xff]
    %v1319 = vld [vmem:[#allocation6 + $0x110] sm:$0xff]
    %v1320 = vld [vmem:[#allocation6 + $0x118] sm:$0xff]
    %v1321 = vld [vmem:[#allocation6 + $0x120] sm:$0xff]
    %v1322 = vld [vmem:[#allocation6 + $0x128] sm:$0xff]
    %v1323 = vld [vmem:[#allocation6 + $0x130] sm:$0xff]
    %v1324 = vld [vmem:[#allocation6 + $0x138] sm:$0xff]
    %v1325 = vld [vmem:[#allocation6 + $0x140] sm:$0xff]
    %v1326 = vld [vmem:[#allocation6 + $0x148] sm:$0xff]
    %v1327 = vld [vmem:[#allocation6 + $0x150] sm:$0xff]
    %v1328 = vld [vmem:[#allocation6 + $0x158] sm:$0xff]
    %v1329 = vld [vmem:[#allocation6 + $0x160] sm:$0xff]
    %v1330 = vld [vmem:[#allocation6 + $0x168] sm:$0xff]
    %v1331 = vld [vmem:[#allocation6 + $0x170] sm:$0xff]
    %v1332 = vld [vmem:[#allocation6 + $0x178] sm:$0xff]
    %v1333 = vld [vmem:[#allocation6 + $0x180] sm:$0xff]
    %v1334 = vld [vmem:[#allocation6 + $0x188] sm:$0xff]
    %v1335 = vld [vmem:[#allocation6 + $0x190] sm:$0xff]
    %v1336 = vld [vmem:[#allocation6 + $0x198] sm:$0xff]
    %v1337 = vld [vmem:[#allocation6 + $0x1a0] sm:$0xff]
    %v1338 = vld [vmem:[#allocation6 + $0x1a8] sm:$0xff]
    %v1339 = vld [vmem:[#allocation6 + $0x1b0] sm:$0xff]
    %v1340 = vld [vmem:[#allocation6 + $0x1b8] sm:$0xff]
    %v1341 = vld [vmem:[#allocation6 + $0x1c0] sm:$0xff]
    %v1342 = vld [vmem:[#allocation6 + $0x1c8] sm:$0xff]
    %v1343 = vld [vmem:[#allocation6 + $0x1d0] sm:$0xff]
    %v1344 = vld [vmem:[#allocation6 + $0x1d8] sm:$0xff]
    %v1345 = vld [vmem:[#allocation6 + $0x1e0] sm:$0xff]
    %v1346 = vld [vmem:[#allocation6 + $0x1e8] sm:$0xff]
    %v1347 = vld [vmem:[#allocation6 + $0x1f0] sm:$0xff]
    %v1348 = vld [vmem:[#allocation6 + $0x1f8] sm:$0xff]
    %v1349 = vld [vmem:[#allocation6 + $0x200] sm:$0xff]
    %v1350 = vld [vmem:[#allocation6 + $0x208] sm:$0xff]
    %v1351 = vld [vmem:[#allocation6 + $0x210] sm:$0xff]
    %v1352 = vld [vmem:[#allocation6 + $0x218] sm:$0xff]
    %v1353 = vld [vmem:[#allocation6 + $0x220] sm:$0xff]
    %v1354 = vld [vmem:[#allocation6 + $0x228] sm:$0xff]
    %v1355 = vld [vmem:[#allocation6 + $0x230] sm:$0xff]
    %v1356 = vld [vmem:[#allocation6 + $0x238] sm:$0xff]
    %v1357 = vld [vmem:[#allocation6 + $0x240] sm:$0xff]
    %v1358 = vld [vmem:[#allocation6 + $0x248] sm:$0xff]
    %v1359 = vld [vmem:[#allocation6 + $0x250] sm:$0xff]
    %v1360 = vld [vmem:[#allocation6 + $0x258] sm:$0xff]
    %v1361 = vld [vmem:[#allocation6 + $0x260] sm:$0xff]
    %v1362 = vld [vmem:[#allocation6 + $0x268] sm:$0xff]
    %v1363 = vld [vmem:[#allocation6 + $0x270] sm:$0xff]
    %v1364 = vld [vmem:[#allocation6 + $0x278] sm:$0xff]
    %v1365 = vld [vmem:[#allocation6 + $0x280] sm:$0xff]
    %v1366 = vld [vmem:[#allocation6 + $0x288] sm:$0xff]
    %v1367 = vld [vmem:[#allocation6 + $0x290] sm:$0xff]
    %v1368 = vld [vmem:[#allocation6 + $0x298] sm:$0xff]
    %v1369 = vld [vmem:[#allocation6 + $0x2a0] sm:$0xff]
    %v1370 = vld [vmem:[#allocation6 + $0x2a8] sm:$0xff]
    %v1371 = vld [vmem:[#allocation6 + $0x2b0] sm:$0xff]
    %v1372 = vld [vmem:[#allocation6 + $0x2b8] sm:$0xff]
    %v1373 = vld [vmem:[#allocation6 + $0x2c0] sm:$0xff]
    %v1374 = vld [vmem:[#allocation6 + $0x2c8] sm:$0xff]
    %v1375 = vld [vmem:[#allocation6 + $0x2d0] sm:$0xff]
    %v1376 = vld [vmem:[#allocation6 + $0x2d8] sm:$0xff]
    %v1377 = vld [vmem:[#allocation6 + $0x2e0] sm:$0xff]
    %v1378 = vld [vmem:[#allocation6 + $0x2e8] sm:$0xff]
    %v1379 = vld [vmem:[#allocation6 + $0x2f0] sm:$0xff]
    %v1380 = vld [vmem:[#allocation6 + $0x2f8] sm:$0xff]
    %v1381 = vld [vmem:[#allocation6 + $0x300] sm:$0xff]
    %v1382 = vld [vmem:[#allocation6 + $0x308] sm:$0xff]
    %v1383 = vld [vmem:[#allocation6 + $0x310] sm:$0xff]
    %v1384 = vld [vmem:[#allocation6 + $0x318] sm:$0xff]
    %v1385 = vld [vmem:[#allocation6 + $0x320] sm:$0xff]
    %v1386 = vld [vmem:[#allocation6 + $0x328] sm:$0xff]
    %v1387 = vld [vmem:[#allocation6 + $0x330] sm:$0xff]
    %v1388 = vld [vmem:[#allocation6 + $0x338] sm:$0xff]
    %v1389 = vld [vmem:[#allocation6 + $0x340] sm:$0xff]
    %v1390 = vld [vmem:[#allocation6 + $0x348] sm:$0xff]
    %v1391 = vld [vmem:[#allocation6 + $0x350] sm:$0xff]
    %v1392 = vld [vmem:[#allocation6 + $0x358] sm:$0xff]
    %v1393 = vld [vmem:[#allocation6 + $0x360] sm:$0xff]
    %v1394 = vld [vmem:[#allocation6 + $0x368] sm:$0xff]
    %v1395 = vld [vmem:[#allocation6 + $0x370] sm:$0xff]
    %v1396 = vld [vmem:[#allocation6 + $0x378] sm:$0xff]
    %v1397 = vld [vmem:[#allocation6 + $0x380] sm:$0xff]
    %v1398 = vld [vmem:[#allocation6 + $0x388] sm:$0xff]
    %v1399 = vld [vmem:[#allocation6 + $0x390] sm:$0xff]
    %v1400 = vld [vmem:[#allocation6 + $0x398] sm:$0xff]
    %v1401 = vld [vmem:[#allocation6 + $0x3a0] sm:$0xff]
    %v1402 = vld [vmem:[#allocation6 + $0x3a8] sm:$0xff]
    %v1403 = vld [vmem:[#allocation6 + $0x3b0] sm:$0xff]
    %v1404 = vld [vmem:[#allocation6 + $0x3b8] sm:$0xff]
    %v1405 = vld [vmem:[#allocation6 + $0x3c0] sm:$0xff]
    %v1406 = vld [vmem:[#allocation6 + $0x3c8] sm:$0xff]
    %v1407 = vld [vmem:[#allocation6 + $0x3d0] sm:$0xff]
    %v1408 = vld [vmem:[#allocation6 + $0x3d8] sm:$0xff]
    %v1409 = vld [vmem:[#allocation6 + $0x3e0] sm:$0xff]
    %v1410 = vld [vmem:[#allocation6 + $0x3e8] sm:$0xff]
    %v1411 = vld [vmem:[#allocation6 + $0x3f0] sm:$0xff]
    %v1412 = vld [vmem:[#allocation6 + $0x3f8] sm:$0xff]
    %v1413 = vld [vmem:[#allocation7] sm:$0x3]
    %v1415 = vlaneseq
    %v1416 = vshrl.u32 %v1415, 7
    %v1417 = vsub.s32 0, %v1416
    %v1418 = vrot.slane %v1413, %v1417
    %v1419 = vlaneseq
    %v1420 = vshrl.u32 %v1419, 7
    %v1421 = vsub.s32 1, %v1420
    %v1422 = vrot.slane %v1413, %v1421
    %1425 = vmatprep.subr.mxu0 %v1286
    %1426 = vmatpush1.msra.mxu0 %v1285
    %1427 = vmatprep.subr.mxu0 %v1288
    %1428 = vmatpush1.msra.mxu0 %v1287
    %1429 = vmatprep.subr.mxu0 %v1290
    %1430 = vmatpush1.msra.mxu0 %v1289
    %1431 = vmatprep.subr.mxu0 %v1292
    %1432 = vmatpush1.msra.mxu0 %v1291
    %1433 = vmatprep.subr.mxu0 %v1294
    %1434 = vmatpush1.msra.mxu0 %v1293
    %1435 = vmatprep.subr.mxu0 %v1296
    %1436 = vmatpush1.msra.mxu0 %v1295
    %1437 = vmatprep.subr.mxu0 %v1298
    %1438 = vmatpush1.msra.mxu0 %v1297
    %1439 = vmatprep.subr.mxu0 %v1300
    %1440 = vmatpush1.msra.mxu0 %v1299
    %1441 = vmatprep.subr.mxu0 %v1302
    %1442 = vmatpush1.msra.mxu0 %v1301
    %1443 = vmatprep.subr.mxu0 %v1304
    %1444 = vmatpush1.msra.mxu0 %v1303
    %1445 = vmatprep.subr.mxu0 %v1306
    %1446 = vmatpush1.msra.mxu0 %v1305
    %1447 = vmatprep.subr.mxu0 %v1308
    %1448 = vmatpush1.msra.mxu0 %v1307
    %1449 = vmatprep.subr.mxu0 %v1310
    %1450 = vmatpush1.msra.mxu0 %v1309
    %1451 = vmatprep.subr.mxu0 %v1312
    %1452 = vmatpush1.msra.mxu0 %v1311
    %1453 = vmatprep.subr.mxu0 %v1314
    %1454 = vmatpush1.msra.mxu0 %v1313
    %1455 = vmatprep.subr.mxu0 %v1316
    %1456 = vmatpush1.msra.mxu0 %v1315
    %1457 = vmatprep.subr.mxu0 %v1318
    %1458 = vmatpush1.msra.mxu0 %v1317
    %1459 = vmatprep.subr.mxu0 %v1320
    %1460 = vmatpush1.msra.mxu0 %v1319
    %1461 = vmatprep.subr.mxu0 %v1322
    %1462 = vmatpush1.msra.mxu0 %v1321
    %1463 = vmatprep.subr.mxu0 %v1324
    %1464 = vmatpush1.msra.mxu0 %v1323
    %1465 = vmatprep.subr.mxu0 %v1326
    %1466 = vmatpush1.msra.mxu0 %v1325
    %1467 = vmatprep.subr.mxu0 %v1328
    %1468 = vmatpush1.msra.mxu0 %v1327
    %1469 = vmatprep.subr.mxu0 %v1330
    %1470 = vmatpush1.msra.mxu0 %v1329
    %1471 = vmatprep.subr.mxu0 %v1332
    %1472 = vmatpush1.msra.mxu0 %v1331
    %1473 = vmatprep.subr.mxu0 %v1334
    %1474 = vmatpush1.msra.mxu0 %v1333
    %1475 = vmatprep.subr.mxu0 %v1336
    %1476 = vmatpush1.msra.mxu0 %v1335
    %1477 = vmatprep.subr.mxu0 %v1338
    %1478 = vmatpush1.msra.mxu0 %v1337
    %1479 = vmatprep.subr.mxu0 %v1340
    %1480 = vmatpush1.msra.mxu0 %v1339
    %1481 = vmatprep.subr.mxu0 %v1342
    %1482 = vmatpush1.msra.mxu0 %v1341
    %1483 = vmatprep.subr.mxu0 %v1344
    %1484 = vmatpush1.msra.mxu0 %v1343
    %1485 = vmatprep.subr.mxu0 %v1346
    %1486 = vmatpush1.msra.mxu0 %v1345
    %1487 = vmatprep.subr.mxu0 %v1348
    %1488 = vmatpush1.msra.mxu0 %v1347
    %1489 = vmatprep.mubr.f32.mxu0 %v1282
    %1490 = vmatmul.mubr.f32.gmra.mrb[0].mxu0 %v1281
    %v1491 = vpop.f32.mrb[0].mxu0
    %v1492 = vadd.f32 %v1418, %v1491
    %v1493 = vpop.f32.mrb[0].mxu0
    %v1494 = vadd.f32 %v1422, %v1493
    %1495 = vdwg.mxu0
    %1496 = vmatprep.subr.mxu0 %v1350
    %1497 = vmatpush1.msra.mxu0 %v1349
    %1498 = vmatprep.subr.mxu0 %v1352
    %1499 = vmatpush1.msra.mxu0 %v1351
    %1500 = vmatprep.subr.mxu0 %v1354
    %1501 = vmatpush1.msra.mxu0 %v1353
    %1502 = vmatprep.subr.mxu0 %v1356
    %1503 = vmatpush1.msra.mxu0 %v1355
    %1504 = vmatprep.subr.mxu0 %v1358
    %1505 = vmatpush1.msra.mxu0 %v1357
    %1506 = vmatprep.subr.mxu0 %v1360
    %1507 = vmatpush1.msra.mxu0 %v1359
    %1508 = vmatprep.subr.mxu0 %v1362
    %1509 = vmatpush1.msra.mxu0 %v1361
    %1510 = vmatprep.subr.mxu0 %v1364
    %1511 = vmatpush1.msra.mxu0 %v1363
    %1512 = vmatprep.subr.mxu0 %v1366
    %1513 = vmatpush1.msra.mxu0 %v1365
    %1514 = vmatprep.subr.mxu0 %v1368
    %1515 = vmatpush1.msra.mxu0 %v1367
    %1516 = vmatprep.subr.mxu0 %v1370
    %1517 = vmatpush1.msra.mxu0 %v1369
    %1518 = vmatprep.subr.mxu0 %v1372
    %1519 = vmatpush1.msra.mxu0 %v1371
    %1520 = vmatprep.subr.mxu0 %v1374
    %1521 = vmatpush1.msra.mxu0 %v1373
    %1522 = vmatprep.subr.mxu0 %v1376
    %1523 = vmatpush1.msra.mxu0 %v1375
    %1524 = vmatprep.subr.mxu0 %v1378
    %1525 = vmatpush1.msra.mxu0 %v1377
    %1526 = vmatprep.subr.mxu0 %v1380
    %1527 = vmatpush1.msra.mxu0 %v1379
    %1528 = vmatprep.subr.mxu0 %v1382
    %1529 = vmatpush1.msra.mxu0 %v1381
    %1530 = vmatprep.subr.mxu0 %v1384
    %1531 = vmatpush1.msra.mxu0 %v1383
    %1532 = vmatprep.subr.mxu0 %v1386
    %1533 = vmatpush1.msra.mxu0 %v1385
    %1534 = vmatprep.subr.mxu0 %v1388
    %1535 = vmatpush1.msra.mxu0 %v1387
    %1536 = vmatprep.subr.mxu0 %v1390
    %1537 = vmatpush1.msra.mxu0 %v1389
    %1538 = vmatprep.subr.mxu0 %v1392
    %1539 = vmatpush1.msra.mxu0 %v1391
    %1540 = vmatprep.subr.mxu0 %v1394
    %1541 = vmatpush1.msra.mxu0 %v1393
    %1542 = vmatprep.subr.mxu0 %v1396
    %1543 = vmatpush1.msra.mxu0 %v1395
    %1544 = vmatprep.subr.mxu0 %v1398
    %1545 = vmatpush1.msra.mxu0 %v1397
    %1546 = vmatprep.subr.mxu0 %v1400
    %1547 = vmatpush1.msra.mxu0 %v1399
    %1548 = vmatprep.subr.mxu0 %v1402
    %1549 = vmatpush1.msra.mxu0 %v1401
    %1550 = vmatprep.subr.mxu0 %v1404
    %1551 = vmatpush1.msra.mxu0 %v1403
    %1552 = vmatprep.subr.mxu0 %v1406
    %1553 = vmatpush1.msra.mxu0 %v1405
    %1554 = vmatprep.subr.mxu0 %v1408
    %1555 = vmatpush1.msra.mxu0 %v1407
    %1556 = vmatprep.subr.mxu0 %v1410
    %1557 = vmatpush1.msra.mxu0 %v1409
    %1558 = vmatprep.subr.mxu0 %v1412
    %1559 = vmatpush1.msra.mxu0 %v1411
    %1560 = vmatprep.mubr.f32.mxu0 %v1284
    %1561 = vmatmul.mubr.f32.gmra.mrb[0].mxu0 %v1283
    %v1562 = vpop.f32.mrb[0].mxu0
    %v1563 = vadd.f32 %v1492, %v1562
    %v1564 = vpop.f32.mrb[0].mxu0
    %v1565 = vadd.f32 %v1494, %v1564
    %1566 = vdwg.mxu0
    %v1567 = vmax.f32 %v1563, 0.0
    %v1568 = vmax.f32 %v1565, 0.0
    %v1569 = vld [vmem:[#allocation9] sm:$0xff]
    %v1570 = vld [vmem:[#allocation9 + $0x8] sm:$0xff]
    %v1571 = vld [vmem:[#allocation9 + $0x10] sm:$0xff]
    %v1572 = vld [vmem:[#allocation9 + $0x18] sm:$0xff]
    %v1573 = vld [vmem:[#allocation9 + $0x20] sm:$0xff]
    %v1574 = vld [vmem:[#allocation9 + $0x28] sm:$0xff]
    %v1575 = vld [vmem:[#allocation9 + $0x30] sm:$0xff]
    %v1576 = vld [vmem:[#allocation9 + $0x38] sm:$0xff]
    %v1577 = vld [vmem:[#allocation9 + $0x40] sm:$0xff]
    %v1578 = vld [vmem:[#allocation9 + $0x48] sm:$0xff]
    %v1579 = vld [vmem:[#allocation9 + $0x50] sm:$0xff]
    %v1580 = vld [vmem:[#allocation9 + $0x58] sm:$0xff]
    %v1581 = vld [vmem:[#allocation9 + $0x60] sm:$0xff]
    %v1582 = vld [vmem:[#allocation9 + $0x68] sm:$0xff]
    %v1583 = vld [vmem:[#allocation9 + $0x70] sm:$0xff]
    %v1584 = vld [vmem:[#allocation9 + $0x78] sm:$0xff]
    %v1585 = vld [vmem:[#allocation9 + $0x80] sm:$0xff]
    %v1586 = vld [vmem:[#allocation9 + $0x88] sm:$0xff]
    %v1587 = vld [vmem:[#allocation9 + $0x90] sm:$0xff]
    %v1588 = vld [vmem:[#allocation9 + $0x98] sm:$0xff]
    %v1589 = vld [vmem:[#allocation9 + $0xa0] sm:$0xff]
    %v1590 = vld [vmem:[#allocation9 + $0xa8] sm:$0xff]
    %v1591 = vld [vmem:[#allocation9 + $0xb0] sm:$0xff]
    %v1592 = vld [vmem:[#allocation9 + $0xb8] sm:$0xff]
    %v1593 = vld [vmem:[#allocation9 + $0xc0] sm:$0xff]
    %v1594 = vld [vmem:[#allocation9 + $0xc8] sm:$0xff]
    %v1595 = vld [vmem:[#allocation9 + $0xd0] sm:$0xff]
    %v1596 = vld [vmem:[#allocation9 + $0xd8] sm:$0xff]
    %v1597 = vld [vmem:[#allocation9 + $0xe0] sm:$0xff]
    %v1598 = vld [vmem:[#allocation9 + $0xe8] sm:$0xff]
    %v1599 = vld [vmem:[#allocation9 + $0xf0] sm:$0xff]
    %v1600 = vld [vmem:[#allocation9 + $0xf8] sm:$0xff]
    %v1601 = vld [vmem:[#allocation10] sm:$0x1]
    %v1603 = vlaneseq
    %v1604 = vshrl.u32 %v1603, 7
    %v1605 = vsub.s32 0, %v1604
    %v1606 = vrot.slane %v1601, %v1605
    %1608 = vmatprep.subr.mxu0 0.0
    %1609 = vmatpush1.msra.mxu0 %v1569
    %1610 = vmatprep.subr.mxu0 0.0
    %1611 = vmatpush1.msra.mxu0 %v1570
    %1612 = vmatprep.subr.mxu0 0.0
    %1613 = vmatpush1.msra.mxu0 %v1571
    %1614 = vmatprep.subr.mxu0 0.0
    %1615 = vmatpush1.msra.mxu0 %v1572
    %1616 = vmatprep.subr.mxu0 0.0
    %1617 = vmatpush1.msra.mxu0 %v1573
    %1618 = vmatprep.subr.mxu0 0.0
    %1619 = vmatpush1.msra.mxu0 %v1574
    %1620 = vmatprep.subr.mxu0 0.0
    %1621 = vmatpush1.msra.mxu0 %v1575
    %1622 = vmatprep.subr.mxu0 0.0
    %1623 = vmatpush1.msra.mxu0 %v1576
    %1624 = vmatprep.subr.mxu0 0.0
    %1625 = vmatpush1.msra.mxu0 %v1577
    %1626 = vmatprep.subr.mxu0 0.0
    %1627 = vmatpush1.msra.mxu0 %v1578
    %1628 = vmatprep.subr.mxu0 0.0
    %1629 = vmatpush1.msra.mxu0 %v1579
    %1630 = vmatprep.subr.mxu0 0.0
    %1631 = vmatpush1.msra.mxu0 %v1580
    %1632 = vmatprep.subr.mxu0 0.0
    %1633 = vmatpush1.msra.mxu0 %v1581
    %1634 = vmatprep.subr.mxu0 0.0
    %1635 = vmatpush1.msra.mxu0 %v1582
    %1636 = vmatprep.subr.mxu0 0.0
    %1637 = vmatpush1.msra.mxu0 %v1583
    %1638 = vmatprep.subr.mxu0 0.0
    %1639 = vmatpush1.msra.mxu0 %v1584
    %1640 = vmatprep.subr.mxu0 0.0
    %1641 = vmatpush1.msra.mxu0 %v1585
    %1642 = vmatprep.subr.mxu0 0.0
    %1643 = vmatpush1.msra.mxu0 %v1586
    %1644 = vmatprep.subr.mxu0 0.0
    %1645 = vmatpush1.msra.mxu0 %v1587
    %1646 = vmatprep.subr.mxu0 0.0
    %1647 = vmatpush1.msra.mxu0 %v1588
    %1648 = vmatprep.subr.mxu0 0.0
    %1649 = vmatpush1.msra.mxu0 %v1589
    %1650 = vmatprep.subr.mxu0 0.0
    %1651 = vmatpush1.msra.mxu0 %v1590
    %1652 = vmatprep.subr.mxu0 0.0
    %1653 = vmatpush1.msra.mxu0 %v1591
    %1654 = vmatprep.subr.mxu0 0.0
    %1655 = vmatpush1.msra.mxu0 %v1592
    %1656 = vmatprep.subr.mxu0 0.0
    %1657 = vmatpush1.msra.mxu0 %v1593
    %1658 = vmatprep.subr.mxu0 0.0
    %1659 = vmatpush1.msra.mxu0 %v1594
    %1660 = vmatprep.subr.mxu0 0.0
    %1661 = vmatpush1.msra.mxu0 %v1595
    %1662 = vmatprep.subr.mxu0 0.0
    %1663 = vmatpush1.msra.mxu0 %v1596
    %1664 = vmatprep.subr.mxu0 0.0
    %1665 = vmatpush1.msra.mxu0 %v1597
    %1666 = vmatprep.subr.mxu0 0.0
    %1667 = vmatpush1.msra.mxu0 %v1598
    %1668 = vmatprep.subr.mxu0 0.0
    %1669 = vmatpush1.msra.mxu0 %v1599
    %1670 = vmatprep.subr.mxu0 0.0
    %1671 = vmatpush1.msra.mxu0 %v1600
    %1672 = vmatprep.mubr.f32.mxu0 %v1568
    %1673 = vmatmul.mubr.f32.gmra.mrb[0].mxu0 %v1567
    %v1674 = vpop.f32.mrb[0].mxu0
    %v1675 = vadd.f32 %v1606, %v1674
    %v1676 = vpop.f32.mrb[0].mxu0
    %1677 = vdwg.mxu0
    %v1678 = vmax.f32 %v1675, 0.0
    %v1679 = vld [vmem:[#allocation12] sm:$0xff]
    %v1680 = vld [vmem:[#allocation12 + $0x8] sm:$0xff]
    %v1681 = vld [vmem:[#allocation12 + $0x10] sm:$0xff]
    %v1682 = vld [vmem:[#allocation12 + $0x18] sm:$0xff]
    %v1683 = vld [vmem:[#allocation12 + $0x20] sm:$0xff]
    %v1684 = vld [vmem:[#allocation12 + $0x28] sm:$0xff]
    %v1685 = vld [vmem:[#allocation12 + $0x30] sm:$0xff]
    %v1686 = vld [vmem:[#allocation12 + $0x38] sm:$0xff]
    %v1687 = vld [vmem:[#allocation12 + $0x40] sm:$0xff]
    %v1688 = vld [vmem:[#allocation12 + $0x48] sm:$0xff]
    %v1689 = vld [vmem:[#allocation12 + $0x50] sm:$0xff]
    %v1690 = vld [vmem:[#allocation12 + $0x58] sm:$0xff]
    %v1691 = vld [vmem:[#allocation12 + $0x60] sm:$0xff]
    %v1692 = vld [vmem:[#allocation12 + $0x68] sm:$0xff]
    %v1693 = vld [vmem:[#allocation12 + $0x70] sm:$0xff]
    %v1694 = vld [vmem:[#allocation12 + $0x78] sm:$0xff]
    %v1695 = vld [vmem:[#allocation12 + $0x80] sm:$0xff]
    %v1696 = vld [vmem:[#allocation12 + $0x88] sm:$0xff]
    %v1697 = vld [vmem:[#allocation12 + $0x90] sm:$0xff]
    %v1698 = vld [vmem:[#allocation12 + $0x98] sm:$0xff]
    %v1699 = vld [vmem:[#allocation12 + $0xa0] sm:$0xff]
    %v1700 = vld [vmem:[#allocation12 + $0xa8] sm:$0xff]
    %v1701 = vld [vmem:[#allocation12 + $0xb0] sm:$0xff]
    %v1702 = vld [vmem:[#allocation12 + $0xb8] sm:$0xff]
    %v1703 = vld [vmem:[#allocation12 + $0xc0] sm:$0xff]
    %v1704 = vld [vmem:[#allocation12 + $0xc8] sm:$0xff]
    %v1705 = vld [vmem:[#allocation12 + $0xd0] sm:$0xff]
    %v1706 = vld [vmem:[#allocation12 + $0xd8] sm:$0xff]
    %v1707 = vld [vmem:[#allocation12 + $0xe0] sm:$0xff]
    %v1708 = vld [vmem:[#allocation12 + $0xe8] sm:$0xff]
    %v1709 = vld [vmem:[#allocation12 + $0xf0] sm:$0xff]
    %v1710 = vld [vmem:[#allocation12 + $0xf8] sm:$0xff]
    %v1711 = vld [vmem:[#allocation12 + $0x100] sm:$0xff]
    %v1712 = vld [vmem:[#allocation12 + $0x108] sm:$0xff]
    %v1713 = vld [vmem:[#allocation12 + $0x110] sm:$0xff]
    %v1714 = vld [vmem:[#allocation12 + $0x118] sm:$0xff]
    %v1715 = vld [vmem:[#allocation12 + $0x120] sm:$0xff]
    %v1716 = vld [vmem:[#allocation12 + $0x128] sm:$0xff]
    %v1717 = vld [vmem:[#allocation12 + $0x130] sm:$0xff]
    %v1718 = vld [vmem:[#allocation12 + $0x138] sm:$0xff]
    %v1719 = vld [vmem:[#allocation12 + $0x140] sm:$0xff]
    %v1720 = vld [vmem:[#allocation12 + $0x148] sm:$0xff]
    %v1721 = vld [vmem:[#allocation12 + $0x150] sm:$0xff]
    %v1722 = vld [vmem:[#allocation12 + $0x158] sm:$0xff]
    %v1723 = vld [vmem:[#allocation12 + $0x160] sm:$0xff]
    %v1724 = vld [vmem:[#allocation12 + $0x168] sm:$0xff]
    %v1725 = vld [vmem:[#allocation12 + $0x170] sm:$0xff]
    %v1726 = vld [vmem:[#allocation12 + $0x178] sm:$0xff]
    %v1727 = vld [vmem:[#allocation12 + $0x180] sm:$0xff]
    %v1728 = vld [vmem:[#allocation12 + $0x188] sm:$0xff]
    %v1729 = vld [vmem:[#allocation12 + $0x190] sm:$0xff]
    %v1730 = vld [vmem:[#allocation12 + $0x198] sm:$0xff]
    %v1731 = vld [vmem:[#allocation12 + $0x1a0] sm:$0xff]
    %v1732 = vld [vmem:[#allocation12 + $0x1a8] sm:$0xff]
    %v1733 = vld [vmem:[#allocation12 + $0x1b0] sm:$0xff]
    %v1734 = vld [vmem:[#allocation12 + $0x1b8] sm:$0xff]
    %v1735 = vld [vmem:[#allocation12 + $0x1c0] sm:$0xff]
    %v1736 = vld [vmem:[#allocation12 + $0x1c8] sm:$0xff]
    %v1737 = vld [vmem:[#allocation12 + $0x1d0] sm:$0xff]
    %v1738 = vld [vmem:[#allocation12 + $0x1d8] sm:$0xff]
    %v1739 = vld [vmem:[#allocation12 + $0x1e0] sm:$0xff]
    %v1740 = vld [vmem:[#allocation12 + $0x1e8] sm:$0xff]
    %v1741 = vld [vmem:[#allocation12 + $0x1f0] sm:$0xff]
    %v1742 = vld [vmem:[#allocation12 + $0x1f8] sm:$0xff]
    %v1743 = vld [vmem:[#allocation12 + $0x200] sm:$0xff]
    %v1744 = vld [vmem:[#allocation12 + $0x208] sm:$0xff]
    %v1745 = vld [vmem:[#allocation12 + $0x210] sm:$0xff]
    %v1746 = vld [vmem:[#allocation12 + $0x218] sm:$0xff]
    %v1747 = vld [vmem:[#allocation12 + $0x220] sm:$0xff]
    %v1748 = vld [vmem:[#allocation12 + $0x228] sm:$0xff]
    %v1749 = vld [vmem:[#allocation12 + $0x230] sm:$0xff]
    %v1750 = vld [vmem:[#allocation12 + $0x238] sm:$0xff]
    %v1751 = vld [vmem:[#allocation12 + $0x240] sm:$0xff]
    %v1752 = vld [vmem:[#allocation12 + $0x248] sm:$0xff]
    %v1753 = vld [vmem:[#allocation12 + $0x250] sm:$0xff]
    %v1754 = vld [vmem:[#allocation12 + $0x258] sm:$0xff]
    %v1755 = vld [vmem:[#allocation12 + $0x260] sm:$0xff]
    %v1756 = vld [vmem:[#allocation12 + $0x268] sm:$0xff]
    %v1757 = vld [vmem:[#allocation12 + $0x270] sm:$0xff]
    %v1758 = vld [vmem:[#allocation12 + $0x278] sm:$0xff]
    %v1759 = vld [vmem:[#allocation12 + $0x280] sm:$0xff]
    %v1760 = vld [vmem:[#allocation12 + $0x288] sm:$0xff]
    %v1761 = vld [vmem:[#allocation12 + $0x290] sm:$0xff]
    %v1762 = vld [vmem:[#allocation12 + $0x298] sm:$0xff]
    %v1763 = vld [vmem:[#allocation12 + $0x2a0] sm:$0xff]
    %v1764 = vld [vmem:[#allocation12 + $0x2a8] sm:$0xff]
    %v1765 = vld [vmem:[#allocation12 + $0x2b0] sm:$0xff]
    %v1766 = vld [vmem:[#allocation12 + $0x2b8] sm:$0xff]
    %v1767 = vld [vmem:[#allocation12 + $0x2c0] sm:$0xff]
    %v1768 = vld [vmem:[#allocation12 + $0x2c8] sm:$0xff]
    %v1769 = vld [vmem:[#allocation12 + $0x2d0] sm:$0xff]
    %v1770 = vld [vmem:[#allocation12 + $0x2d8] sm:$0xff]
    %v1771 = vld [vmem:[#allocation12 + $0x2e0] sm:$0xff]
    %v1772 = vld [vmem:[#allocation12 + $0x2e8] sm:$0xff]
    %v1773 = vld [vmem:[#allocation12 + $0x2f0] sm:$0xff]
    %v1774 = vld [vmem:[#allocation12 + $0x2f8] sm:$0xff]
    %v1775 = vld [vmem:[#allocation12 + $0x300] sm:$0xff]
    %v1776 = vld [vmem:[#allocation12 + $0x308] sm:$0xff]
    %v1777 = vld [vmem:[#allocation12 + $0x310] sm:$0xff]
    %v1778 = vld [vmem:[#allocation12 + $0x318] sm:$0xff]
    %v1779 = vld [vmem:[#allocation12 + $0x320] sm:$0xff]
    %v1780 = vld [vmem:[#allocation12 + $0x328] sm:$0xff]
    %v1781 = vld [vmem:[#allocation12 + $0x330] sm:$0xff]
    %v1782 = vld [vmem:[#allocation12 + $0x338] sm:$0xff]
    %v1783 = vld [vmem:[#allocation12 + $0x340] sm:$0xff]
    %v1784 = vld [vmem:[#allocation12 + $0x348] sm:$0xff]
    %v1785 = vld [vmem:[#allocation12 + $0x350] sm:$0xff]
    %v1786 = vld [vmem:[#allocation12 + $0x358] sm:$0xff]
    %v1787 = vld [vmem:[#allocation12 + $0x360] sm:$0xff]
    %v1788 = vld [vmem:[#allocation12 + $0x368] sm:$0xff]
    %v1789 = vld [vmem:[#allocation12 + $0x370] sm:$0xff]
    %v1790 = vld [vmem:[#allocation12 + $0x378] sm:$0xff]
    %v1791 = vld [vmem:[#allocation12 + $0x380] sm:$0xff]
    %v1792 = vld [vmem:[#allocation12 + $0x388] sm:$0xff]
    %v1793 = vld [vmem:[#allocation12 + $0x390] sm:$0xff]
    %v1794 = vld [vmem:[#allocation12 + $0x398] sm:$0xff]
    %v1795 = vld [vmem:[#allocation12 + $0x3a0] sm:$0xff]
    %v1796 = vld [vmem:[#allocation12 + $0x3a8] sm:$0xff]
    %v1797 = vld [vmem:[#allocation12 + $0x3b0] sm:$0xff]
    %v1798 = vld [vmem:[#allocation12 + $0x3b8] sm:$0xff]
    %v1799 = vld [vmem:[#allocation12 + $0x3c0] sm:$0xff]
    %v1800 = vld [vmem:[#allocation12 + $0x3c8] sm:$0xff]
    %v1801 = vld [vmem:[#allocation12 + $0x3d0] sm:$0xff]
    %v1802 = vld [vmem:[#allocation12 + $0x3d8] sm:$0xff]
    %v1803 = vld [vmem:[#allocation12 + $0x3e0] sm:$0xff]
    %v1804 = vld [vmem:[#allocation12 + $0x3e8] sm:$0xff]
    %v1805 = vld [vmem:[#allocation12 + $0x3f0] sm:$0xff]
    %v1806 = vld [vmem:[#allocation12 + $0x3f8] sm:$0xff]
    %v1807 = vld [vmem:[#allocation13] sm:$0xff]
    %v1809 = vlaneseq
    %v1810 = vshrl.u32 %v1809, 7
    %v1811 = vsub.s32 0, %v1810
    %v1812 = vrot.slane %v1807, %v1811
    %v1813 = vlaneseq
    %v1814 = vshrl.u32 %v1813, 7
    %v1815 = vsub.s32 1, %v1814
    %v1816 = vrot.slane %v1807, %v1815
    %v1817 = vlaneseq
    %v1818 = vshrl.u32 %v1817, 7
    %v1819 = vsub.s32 2, %v1818
    %v1820 = vrot.slane %v1807, %v1819
    %v1821 = vlaneseq
    %v1822 = vshrl.u32 %v1821, 7
    %v1823 = vsub.s32 3, %v1822
    %v1824 = vrot.slane %v1807, %v1823
    %v1825 = vlaneseq
    %v1826 = vshrl.u32 %v1825, 7
    %v1827 = vsub.s32 4, %v1826
    %v1828 = vrot.slane %v1807, %v1827
    %v1829 = vlaneseq
    %v1830 = vshrl.u32 %v1829, 7
    %v1831 = vsub.s32 5, %v1830
    %v1832 = vrot.slane %v1807, %v1831
    %v1833 = vlaneseq
    %v1834 = vshrl.u32 %v1833, 7
    %v1835 = vsub.s32 6, %v1834
    %v1836 = vrot.slane %v1807, %v1835
    %v1837 = vlaneseq
    %v1838 = vshrl.u32 %v1837, 7
    %v1839 = vsub.s32 7, %v1838
    %v1840 = vrot.slane %v1807, %v1839
    %1849 = vmatprep.subr.mxu0 %v1680
    %1850 = vmatpush1.msra.mxu0 %v1679
    %1851 = vmatprep.subr.mxu0 %v1688
    %1852 = vmatpush1.msra.mxu0 %v1687
    %1853 = vmatprep.subr.mxu0 %v1696
    %1854 = vmatpush1.msra.mxu0 %v1695
    %1855 = vmatprep.subr.mxu0 %v1704
    %1856 = vmatpush1.msra.mxu0 %v1703
    %1857 = vmatprep.subr.mxu0 %v1712
    %1858 = vmatpush1.msra.mxu0 %v1711
    %1859 = vmatprep.subr.mxu0 %v1720
    %1860 = vmatpush1.msra.mxu0 %v1719
    %1861 = vmatprep.subr.mxu0 %v1728
    %1862 = vmatpush1.msra.mxu0 %v1727
    %1863 = vmatprep.subr.mxu0 %v1736
    %1864 = vmatpush1.msra.mxu0 %v1735
    %1865 = vmatprep.subr.mxu0 %v1744
    %1866 = vmatpush1.msra.mxu0 %v1743
    %1867 = vmatprep.subr.mxu0 %v1752
    %1868 = vmatpush1.msra.mxu0 %v1751
    %1869 = vmatprep.subr.mxu0 %v1760
    %1870 = vmatpush1.msra.mxu0 %v1759
    %1871 = vmatprep.subr.mxu0 %v1768
    %1872 = vmatpush1.msra.mxu0 %v1767
    %1873 = vmatprep.subr.mxu0 %v1776
    %1874 = vmatpush1.msra.mxu0 %v1775
    %1875 = vmatprep.subr.mxu0 %v1784
    %1876 = vmatpush1.msra.mxu0 %v1783
    %1877 = vmatprep.subr.mxu0 %v1792
    %1878 = vmatpush1.msra.mxu0 %v1791
    %1879 = vmatprep.subr.mxu0 %v1800
    %1880 = vmatpush1.msra.mxu0 %v1799
    %1881 = vmatprep.subr.mxu0 0.0
    %1882 = vmatpush1.msra.mxu0 0.0
    %1883 = vmatprep.subr.mxu0 0.0
    %1884 = vmatpush1.msra.mxu0 0.0
    %1885 = vmatprep.subr.mxu0 0.0
    %1886 = vmatpush1.msra.mxu0 0.0
    %1887 = vmatprep.subr.mxu0 0.0
    %1888 = vmatpush1.msra.mxu0 0.0
    %1889 = vmatprep.subr.mxu0 0.0
    %1890 = vmatpush1.msra.mxu0 0.0
    %1891 = vmatprep.subr.mxu0 0.0
    %1892 = vmatpush1.msra.mxu0 0.0
    %1893 = vmatprep.subr.mxu0 0.0
    %1894 = vmatpush1.msra.mxu0 0.0
    %1895 = vmatprep.subr.mxu0 0.0
    %1896 = vmatpush1.msra.mxu0 0.0
    %1897 = vmatprep.subr.mxu0 0.0
    %1898 = vmatpush1.msra.mxu0 0.0
    %1899 = vmatprep.subr.mxu0 0.0
    %1900 = vmatpush1.msra.mxu0 0.0
    %1901 = vmatprep.subr.mxu0 0.0
    %1902 = vmatpush1.msra.mxu0 0.0
    %1903 = vmatprep.subr.mxu0 0.0
    %1904 = vmatpush1.msra.mxu0 0.0
    %1905 = vmatprep.subr.mxu0 0.0
    %1906 = vmatpush1.msra.mxu0 0.0
    %1907 = vmatprep.subr.mxu0 0.0
    %1908 = vmatpush1.msra.mxu0 0.0
    %1909 = vmatprep.subr.mxu0 0.0
    %1910 = vmatpush1.msra.mxu0 0.0
    %1911 = vmatprep.subr.mxu0 0.0
    %1912 = vmatpush1.msra.mxu0 0.0
    %1913 = vmatprep.mubr.f32.mxu0 0.0
    %1914 = vmatmul.mubr.f32.gmra.mrb[0].mxu0 %v1678
    %v1915 = vpop.f32.mrb[0].mxu0
    %v1916 = vadd.f32 %v1812, %v1915
    %v1917 = vpop.f32.mrb[0].mxu0
    %v1918 = vadd.f32 %v1816, %v1917
    %1919 = vdwg.mxu0
    %1920 = vmatprep.subr.mxu0 %v1682
    %1921 = vmatpush1.msra.mxu0 %v1681
    %1922 = vmatprep.subr.mxu0 %v1690
    %1923 = vmatpush1.msra.mxu0 %v1689
    %1924 = vmatprep.subr.mxu0 %v1698
    %1925 = vmatpush1.msra.mxu0 %v1697
    %1926 = vmatprep.subr.mxu0 %v1706
    %1927 = vmatpush1.msra.mxu0 %v1705
    %1928 = vmatprep.subr.mxu0 %v1714
    %1929 = vmatpush1.msra.mxu0 %v1713
    %1930 = vmatprep.subr.mxu0 %v1722
    %1931 = vmatpush1.msra.mxu0 %v1721
    %1932 = vmatprep.subr.mxu0 %v1730
    %1933 = vmatpush1.msra.mxu0 %v1729
    %1934 = vmatprep.subr.mxu0 %v1738
    %1935 = vmatpush1.msra.mxu0 %v1737
    %1936 = vmatprep.subr.mxu0 %v1746
    %1937 = vmatpush1.msra.mxu0 %v1745
    %1938 = vmatprep.subr.mxu0 %v1754
    %1939 = vmatpush1.msra.mxu0 %v1753
    %1940 = vmatprep.subr.mxu0 %v1762
    %1941 = vmatpush1.msra.mxu0 %v1761
    %1942 = vmatprep.subr.mxu0 %v1770
    %1943 = vmatpush1.msra.mxu0 %v1769
    %1944 = vmatprep.subr.mxu0 %v1778
    %1945 = vmatpush1.msra.mxu0 %v1777
    %1946 = vmatprep.subr.mxu0 %v1786
    %1947 = vmatpush1.msra.mxu0 %v1785
    %1948 = vmatprep.subr.mxu0 %v1794
    %1949 = vmatpush1.msra.mxu0 %v1793
    %1950 = vmatprep.subr.mxu0 %v1802
    %1951 = vmatpush1.msra.mxu0 %v1801
    %1952 = vmatprep.subr.mxu0 0.0
    %1953 = vmatpush1.msra.mxu0 0.0
    %1954 = vmatprep.subr.mxu0 0.0
    %1955 = vmatpush1.msra.mxu0 0.0
    %1956 = vmatprep.subr.mxu0 0.0
    %1957 = vmatpush1.msra.mxu0 0.0
    %1958 = vmatprep.subr.mxu0 0.0
    %1959 = vmatpush1.msra.mxu0 0.0
    %1960 = vmatprep.subr.mxu0 0.0
    %1961 = vmatpush1.msra.mxu0 0.0
    %1962 = vmatprep.subr.mxu0 0.0
    %1963 = vmatpush1.msra.mxu0 0.0
    %1964 = vmatprep.subr.mxu0 0.0
    %1965 = vmatpush1.msra.mxu0 0.0
    %1966 = vmatprep.subr.mxu0 0.0
    %1967 = vmatpush1.msra.mxu0 0.0
    %1968 = vmatprep.subr.mxu0 0.0
    %1969 = vmatpush1.msra.mxu0 0.0
    %1970 = vmatprep.subr.mxu0 0.0
    %1971 = vmatpush1.msra.mxu0 0.0
    %1972 = vmatprep.subr.mxu0 0.0
    %1973 = vmatpush1.msra.mxu0 0.0
    %1974 = vmatprep.subr.mxu0 0.0
    %1975 = vmatpush1.msra.mxu0 0.0
    %1976 = vmatprep.subr.mxu0 0.0
    %1977 = vmatpush1.msra.mxu0 0.0
    %1978 = vmatprep.subr.mxu0 0.0
    %1979 = vmatpush1.msra.mxu0 0.0
    %1980 = vmatprep.subr.mxu0 0.0
    %1981 = vmatpush1.msra.mxu0 0.0
    %1982 = vmatprep.subr.mxu0 0.0
    %1983 = vmatpush1.msra.mxu0 0.0
    %1984 = vmatprep.mubr.f32.mxu0 0.0
    %1985 = vmatmul.mubr.f32.gmra.mrb[0].mxu0 %v1678
    %v1986 = vpop.f32.mrb[0].mxu0
    %v1987 = vadd.f32 %v1820, %v1986
    %v1988 = vpop.f32.mrb[0].mxu0
    %v1989 = vadd.f32 %v1824, %v1988
    %1990 = vdwg.mxu0
    %1991 = vmatprep.subr.mxu0 %v1684
    %1992 = vmatpush1.msra.mxu0 %v1683
    %1993 = vmatprep.subr.mxu0 %v1692
    %1994 = vmatpush1.msra.mxu0 %v1691
    %1995 = vmatprep.subr.mxu0 %v1700
    %1996 = vmatpush1.msra.mxu0 %v1699
    %1997 = vmatprep.subr.mxu0 %v1708
    %1998 = vmatpush1.msra.mxu0 %v1707
    %1999 = vmatprep.subr.mxu0 %v1716
    %2000 = vmatpush1.msra.mxu0 %v1715
    %2001 = vmatprep.subr.mxu0 %v1724
    %2002 = vmatpush1.msra.mxu0 %v1723
    %2003 = vmatprep.subr.mxu0 %v1732
    %2004 = vmatpush1.msra.mxu0 %v1731
    %2005 = vmatprep.subr.mxu0 %v1740
    %2006 = vmatpush1.msra.mxu0 %v1739
    %2007 = vmatprep.subr.mxu0 %v1748
    %2008 = vmatpush1.msra.mxu0 %v1747
    %2009 = vmatprep.subr.mxu0 %v1756
    %2010 = vmatpush1.msra.mxu0 %v1755
    %2011 = vmatprep.subr.mxu0 %v1764
    %2012 = vmatpush1.msra.mxu0 %v1763
    %2013 = vmatprep.subr.mxu0 %v1772
    %2014 = vmatpush1.msra.mxu0 %v1771
    %2015 = vmatprep.subr.mxu0 %v1780
    %2016 = vmatpush1.msra.mxu0 %v1779
    %2017 = vmatprep.subr.mxu0 %v1788
    %2018 = vmatpush1.msra.mxu0 %v1787
    %2019 = vmatprep.subr.mxu0 %v1796
    %2020 = vmatpush1.msra.mxu0 %v1795
    %2021 = vmatprep.subr.mxu0 %v1804
    %2022 = vmatpush1.msra.mxu0 %v1803
    %2023 = vmatprep.subr.mxu0 0.0
    %2024 = vmatpush1.msra.mxu0 0.0
    %2025 = vmatprep.subr.mxu0 0.0
    %2026 = vmatpush1.msra.mxu0 0.0
    %2027 = vmatprep.subr.mxu0 0.0
    %2028 = vmatpush1.msra.mxu0 0.0
    %2029 = vmatprep.subr.mxu0 0.0
    %2030 = vmatpush1.msra.mxu0 0.0
    %2031 = vmatprep.subr.mxu0 0.0
    %2032 = vmatpush1.msra.mxu0 0.0
    %2033 = vmatprep.subr.mxu0 0.0
    %2034 = vmatpush1.msra.mxu0 0.0
    %2035 = vmatprep.subr.mxu0 0.0
    %2036 = vmatpush1.msra.mxu0 0.0
    %2037 = vmatprep.subr.mxu0 0.0
    %2038 = vmatpush1.msra.mxu0 0.0
    %2039 = vmatprep.subr.mxu0 0.0
    %2040 = vmatpush1.msra.mxu0 0.0
    %2041 = vmatprep.subr.mxu0 0.0
    %2042 = vmatpush1.msra.mxu0 0.0
    %2043 = vmatprep.subr.mxu0 0.0
    %2044 = vmatpush1.msra.mxu0 0.0
    %2045 = vmatprep.subr.mxu0 0.0
    %2046 = vmatpush1.msra.mxu0 0.0
    %2047 = vmatprep.subr.mxu0 0.0
    %2048 = vmatpush1.msra.mxu0 0.0
    %2049 = vmatprep.subr.mxu0 0.0
    %2050 = vmatpush1.msra.mxu0 0.0
    %2051 = vmatprep.subr.mxu0 0.0
    %2052 = vmatpush1.msra.mxu0 0.0
    %2053 = vmatprep.subr.mxu0 0.0
    %2054 = vmatpush1.msra.mxu0 0.0
    %2055 = vmatprep.mubr.f32.mxu0 0.0
    %2056 = vmatmul.mubr.f32.gmra.mrb[0].mxu0 %v1678
    %v2057 = vpop.f32.mrb[0].mxu0
    %v2058 = vadd.f32 %v1828, %v2057
    %v2059 = vpop.f32.mrb[0].mxu0
    %v2060 = vadd.f32 %v1832, %v2059
    %2061 = vdwg.mxu0
    %2062 = vmatprep.subr.mxu0 %v1686
    %2063 = vmatpush1.msra.mxu0 %v1685
    %2064 = vmatprep.subr.mxu0 %v1694
    %2065 = vmatpush1.msra.mxu0 %v1693
    %2066 = vmatprep.subr.mxu0 %v1702
    %2067 = vmatpush1.msra.mxu0 %v1701
    %2068 = vmatprep.subr.mxu0 %v1710
    %2069 = vmatpush1.msra.mxu0 %v1709
    %2070 = vmatprep.subr.mxu0 %v1718
    %2071 = vmatpush1.msra.mxu0 %v1717
    %2072 = vmatprep.subr.mxu0 %v1726
    %2073 = vmatpush1.msra.mxu0 %v1725
    %2074 = vmatprep.subr.mxu0 %v1734
    %2075 = vmatpush1.msra.mxu0 %v1733
    %2076 = vmatprep.subr.mxu0 %v1742
    %2077 = vmatpush1.msra.mxu0 %v1741
    %2078 = vmatprep.subr.mxu0 %v1750
    %2079 = vmatpush1.msra.mxu0 %v1749
    %2080 = vmatprep.subr.mxu0 %v1758
    %2081 = vmatpush1.msra.mxu0 %v1757
    %2082 = vmatprep.subr.mxu0 %v1766
    %2083 = vmatpush1.msra.mxu0 %v1765
    %2084 = vmatprep.subr.mxu0 %v1774
    %2085 = vmatpush1.msra.mxu0 %v1773
    %2086 = vmatprep.subr.mxu0 %v1782
    %2087 = vmatpush1.msra.mxu0 %v1781
    %2088 = vmatprep.subr.mxu0 %v1790
    %2089 = vmatpush1.msra.mxu0 %v1789
    %2090 = vmatprep.subr.mxu0 %v1798
    %2091 = vmatpush1.msra.mxu0 %v1797
    %2092 = vmatprep.subr.mxu0 %v1806
    %2093 = vmatpush1.msra.mxu0 %v1805
    %2094 = vmatprep.subr.mxu0 0.0
    %2095 = vmatpush1.msra.mxu0 0.0
    %2096 = vmatprep.subr.mxu0 0.0
    %2097 = vmatpush1.msra.mxu0 0.0
    %2098 = vmatprep.subr.mxu0 0.0
    %2099 = vmatpush1.msra.mxu0 0.0
    %2100 = vmatprep.subr.mxu0 0.0
    %2101 = vmatpush1.msra.mxu0 0.0
    %2102 = vmatprep.subr.mxu0 0.0
    %2103 = vmatpush1.msra.mxu0 0.0
    %2104 = vmatprep.subr.mxu0 0.0
    %2105 = vmatpush1.msra.mxu0 0.0
    %2106 = vmatprep.subr.mxu0 0.0
    %2107 = vmatpush1.msra.mxu0 0.0
    %2108 = vmatprep.subr.mxu0 0.0
    %2109 = vmatpush1.msra.mxu0 0.0
    %2110 = vmatprep.subr.mxu0 0.0
    %2111 = vmatpush1.msra.mxu0 0.0
    %2112 = vmatprep.subr.mxu0 0.0
    %2113 = vmatpush1.msra.mxu0 0.0
    %2114 = vmatprep.subr.mxu0 0.0
    %2115 = vmatpush1.msra.mxu0 0.0
    %2116 = vmatprep.subr.mxu0 0.0
    %2117 = vmatpush1.msra.mxu0 0.0
    %2118 = vmatprep.subr.mxu0 0.0
    %2119 = vmatpush1.msra.mxu0 0.0
    %2120 = vmatprep.subr.mxu0 0.0
    %2121 = vmatpush1.msra.mxu0 0.0
    %2122 = vmatprep.subr.mxu0 0.0
    %2123 = vmatpush1.msra.mxu0 0.0
    %2124 = vmatprep.subr.mxu0 0.0
    %2125 = vmatpush1.msra.mxu0 0.0
    %2126 = vmatprep.mubr.f32.mxu0 0.0
    %2127 = vmatmul.mubr.f32.gmra.mrb[0].mxu0 %v1678
    %v2128 = vpop.f32.mrb[0].mxu0
    %v2129 = vadd.f32 %v1836, %v2128
    %v2130 = vpop.f32.mrb[0].mxu0
    %v2131 = vadd.f32 %v1840, %v2130
    %2132 = vdwg.mxu0
    %v2141 = vcombine.low %v1916, %v1918
    %v2142 = vcombine.low %v1987, %v1989
    %v2144 = vunpack.c.l.s4 1983009808
    %v2145 = vunpack.c.0.s8 %v2144
    %v2146 = vlaneseq
    %v2147 = vshrl.u32 %v2146, 7
    %v2148 = vsub.s32 %v2145, %v2147
    %v2149 = vrot.slane %v2141, %v2148
    %v2151 = vunpack.c.l.s4 1983009808
    %v2152 = vunpack.c.0.s8 %v2151
    %v2153 = vlaneseq
    %v2154 = vshrl.u32 %v2153, 7
    %v2155 = vsub.s32 %v2152, %v2154
    %v2156 = vrot.slane %v2142, %v2155
    %v2157 = vcombine.low %v2149, %v2156
    %v2158 = vcombine.low %v2058, %v2060
    %v2159 = vcombine.low %v2129, %v2131
    %v2161 = vunpack.c.l.s4 1983009808
    %v2162 = vunpack.c.0.s8 %v2161
    %v2163 = vlaneseq
    %v2164 = vshrl.u32 %v2163, 7
    %v2165 = vsub.s32 %v2162, %v2164
    %v2166 = vrot.slane %v2158, %v2165
    %v2168 = vunpack.c.l.s4 1983009808
    %v2169 = vunpack.c.0.s8 %v2168
    %v2170 = vlaneseq
    %v2171 = vshrl.u32 %v2170, 7
    %v2172 = vsub.s32 %v2169, %v2171
    %v2173 = vrot.slane %v2159, %v2172
    %v2174 = vcombine.low %v2166, %v2173
    %2177 = vst [vmem:[%s9] sm:$0xff] %v2157
    %2178 = vst [vmem:[%s9 + $0x8] sm:$0xff] %v2174
    // Predicated region
    $region70: #{autoencoder_forward.1} parent=1 // pred_check
      _
    $region71: #{autoencoder_forward.1} parent=1 // pred_check_branch
      %2180 = sbr.rel (0) target = $region73
    $region72: #{autoencoder_forward.1} parent=1 // pred_region
      _
    $region73: #{autoencoder_forward.1} parent=1 // pred_fallthru
      _
    // Predicated region
    $region74: #{autoencoder_forward.1} parent=1 // pred_check
      _
    $region75: #{autoencoder_forward.1} parent=1 // pred_check_branch
      %2182 = sbr.rel (0) target = $region77
    $region76: #{autoencoder_forward.1} parent=1 // pred_region
      _
    $region77: #{autoencoder_forward.1} parent=1 // pred_fallthru
      _
    %2183 = vsyncpa [#allocation3], 1
    %2184 = vsyncpa [#allocation5], 1
    %2185 = vsyncpa [#allocation8], 1
    %2186 = vsyncpa [#allocation11], 1
    %2187 = vsyncpa [#allocation14], 1

</llo_original>
